<compile_context>
chip_gen: v7x
topology: tpu7x:2x2x1
jax: 0.10.0
libtpu: 0.0.40
codegen_flags: <defaults>
</compile_context>

<pallas_src>
import functools

import jax
import jax.numpy as jnp
from jax import lax
from jax.experimental import pallas as pl
from jax.experimental.pallas import tpu as pltpu

_VMEM_LIMIT = 32 * 1024 * 1024  # safe on v5e/v6e/v7x (can be raised to 64-96 MiB on v5e/v6e)


def _round_up(x, m):
    return ((x + m - 1) // m) * m


def _pick_time_tile(max_len, batch, emb, hidden, vmem_budget_bytes=8 << 20):
    """Timesteps per GRU grid chunk: double-buffered bf16 x-in + bf16 ctx-out must
    fit the budget (keeps the pipeline alive under v7x's 64 MiB physical VMEM)."""
    per_t = 2 * 2 * (batch * emb + batch * hidden)   # bytes/timestep, both buffers
    tl = (vmem_budget_bytes // max(per_t, 1)) // 8 * 8
    tl = max(8, min(32, tl))                         # cap: time loop is fully unrolled
    return min(tl, _round_up(max_len, 8))


# ----------------------------------------------------------------------------
# GRU kernel: time-chunked grid, persistent VMEM h-carry, fused input projection.
#   x      : (L_pad*B, E)  bf16  time-major-flattened embeddings
#   W_ih   : (E, 3H) bf16,  W_hh : (H, 3H) bf16   (fused gates, order r|z|n)
#   b_comb : (1, 3H) f32 = b_ih + [b_hr | b_hz | 0];   b_hn : (1, H) f32
# Outputs: ctx (L_pad*B, H) bf16 (zero past length when masked), hT (B, H) f32.
# ----------------------------------------------------------------------------
def _gru_kernel(len_ref, h0_ref, x_ref, w_ih_ref, w_hh_ref, b_comb_ref, b_hn_ref,
                ctx_ref, hT_ref, h_ref, *, masked, seq_len, padded_len):
    B, H = h_ref.shape
    TL = x_ref.shape[0] // B
    chunk = pl.program_id(0)

    @pl.when(chunk == 0)
    def _init():
        h_ref[...] = h0_ref[...]

    w_ih = w_ih_ref[...]          # (E, 3H) bf16, resident across chunks
    w_hh = w_hh_ref[...]          # (H, 3H) bf16, resident across chunks
    b_comb = b_comb_ref[...]      # (1, 3H) f32
    b_hn = b_hn_ref[...]          # (1, H)  f32, stays inside r*(.) like torch GRU

    # One MXU matmul for the whole chunk's input projections (off the serial
    # per-step path): (TL*B, E) @ (E, 3H), bf16 operands, f32 accumulate.
    gi_all = jnp.dot(x_ref[...], w_ih, preferred_element_type=jnp.float32) + b_comb

    lens = len_ref[...] if masked else None        # (B, 1) int32 source lengths
    base_t = chunk * TL
    time_guard = (not masked) and (padded_len != seq_len)

    h = h_ref[...]
    for t in range(TL):   # static full unroll: lets LLO overlap stores/adds with MXU
        gi = gi_all[t * B:(t + 1) * B, :]
        gh = jnp.dot(h.astype(jnp.bfloat16), w_hh, preferred_element_type=jnp.float32)
        r = jax.nn.sigmoid(gi[:, 0 * H:1 * H] + gh[:, 0 * H:1 * H])
        z = jax.nn.sigmoid(gi[:, 1 * H:2 * H] + gh[:, 1 * H:2 * H])
        n = jnp.tanh(gi[:, 2 * H:3 * H] + r * (gh[:, 2 * H:3 * H] + b_hn))
        h_new = (1.0 - z) * n + z * h
        if masked:
            valid = (base_t + t) < lens                    # (B,1) pack_padded mask
            h = jnp.where(valid, h_new, h)                 # freeze state past length
            out_t = jnp.where(valid, h, 0.0)               # pad_packed zero-fills ctx
        else:
            if time_guard:   # decoder time padding must not move the carry
                h = jnp.where(base_t + t < seq_len, h_new, h)
            else:
                h = h_new
            out_t = h
        ctx_ref[t * B:(t + 1) * B, :] = out_t.astype(ctx_ref.dtype)

    h_ref[...] = h                        # carry to next chunk

    @pl.when(chunk == pl.num_programs(0) - 1)
    def _final():
        hT_ref[...] = h                   # single final-hidden store


def gru_forward(x2d, lengths_col, h0, w_ih, w_hh, b_comb, b_hn, *,
                masked, seq_len, padded_len, time_tile):
    """x2d: (L_pad*B, E) bf16.  Returns (ctx2d (L_pad*B, H) bf16, h_T (B, H) f32)."""
    B, H = h0.shape
    E = x2d.shape[1]
    G = w_hh.shape[1]
    num_chunks = padded_len // time_tile
    kernel = functools.partial(_gru_kernel, masked=masked, seq_len=seq_len,
                               padded_len=padded_len)
    ctx2d, hT = pl.pallas_call(
        kernel,
        out_shape=(jax.ShapeDtypeStruct((padded_len * B, H), jnp.bfloat16),
                   jax.ShapeDtypeStruct((B, H), jnp.float32)),
        grid_spec=pltpu.PrefetchScalarGridSpec(
            num_scalar_prefetch=0,
            grid=(num_chunks,),                                   # serial over time
            in_specs=[
                pl.BlockSpec((B, 1), lambda i: (0, 0)),               # lengths
                pl.BlockSpec((B, H), lambda i: (0, 0)),               # h0
                pl.BlockSpec((time_tile * B, E), lambda i: (i, 0)),   # x chunk (pipelined)
                pl.BlockSpec((E, G), lambda i: (0, 0)),               # W_ih (resident)
                pl.BlockSpec((H, G), lambda i: (0, 0)),               # W_hh (resident)
                pl.BlockSpec((1, G), lambda i: (0, 0)),               # b_comb
                pl.BlockSpec((1, H), lambda i: (0, 0)),               # b_hn
            ],
            out_specs=[
                pl.BlockSpec((time_tile * B, H), lambda i: (i, 0)),   # ctx chunk
                pl.BlockSpec((B, H), lambda i: (0, 0)),               # final hidden
            ],
            scratch_shapes=[pltpu.VMEM((B, H), jnp.float32)]),        # h carry
        compiler_params=pltpu.CompilerParams(
            dimension_semantics=("arbitrary",),   # recurrence is serial across chunks
            vmem_limit_bytes=_VMEM_LIMIT),
    )(lengths_col, h0, x2d, w_ih, w_hh, b_comb, b_hn)
    return ctx2d, hT


# ----------------------------------------------------------------------------
# GlobalAttention("general"): 8 batch elements per grid step, projections in-kernel.
#   rnn2d : (B*T, H) bf16 batch-major-flattened decoder states
#   ctx   : (B, S, H) bf16 encoder context
# Outputs: out2d (B*T, H) f32 (lane-dense store), attn (B, T, S) f32.
# ----------------------------------------------------------------------------
def _attn_kernel(len_ref, rnn_ref, ctx_ref, w_in_ref, w_out_h_ref, w_out_c_ref,
                 out_ref, attn_ref):
    BB, S, H = ctx_ref.shape
    T = rnn_ref.shape[0] // BB

    h2 = rnn_ref[...]                     # (BB*T, H) bf16
    ctx = ctx_ref[...]                    # (BB, S, H) bf16

    # In-kernel hoisted projections (one lane-dense bf16 MXU matmul each).
    hw2 = jnp.dot(h2, w_in_ref[...], preferred_element_type=jnp.float32)      # h @ W_in
    hwh2 = jnp.dot(h2, w_out_h_ref[...], preferred_element_type=jnp.float32)  # h @ W_out_h

    # Scores: batched bf16 matmul. (f32 reshape is layout-free; cast afterwards.)
    hw = hw2.reshape(BB, T, H).astype(jnp.bfloat16)
    scores = jnp.einsum("bth,bsh->bts", hw, ctx,
                        preferred_element_type=jnp.float32)                   # (BB,T,S)

    lens = len_ref[...].reshape(BB, 1, 1)                                     # int32
    col = lax.broadcasted_iota(jnp.int32, scores.shape, 2)
    scores = jnp.where(col < lens, scores, -1e30)   # finite mask; len==0 rows stay finite

    m = jnp.max(scores, axis=-1, keepdims=True)
    e = jnp.exp(scores - m)
    p = e * pl.reciprocal(jnp.sum(e, axis=-1, keepdims=True))   # exact: rows sum to 1
    attn_ref[...] = p

    c = jnp.einsum("bts,bsh->bth", p.astype(jnp.bfloat16), ctx,
                   preferred_element_type=jnp.float32)                        # (BB,T,H)
    cw = jnp.dot(c.reshape(BB * T, H).astype(jnp.bfloat16), w_out_c_ref[...],
                 preferred_element_type=jnp.float32)
    out_ref[...] = jnp.tanh(cw + hwh2)              # (BB*T, H) f32, lane-dense store


def attention_forward(rnn2d, ctx_bm, lengths_col, w_in, w_out_h, w_out_c):
    B, S, H = ctx_bm.shape
    T = rnn2d.shape[0] // B
    BB = min(B, 8)                        # batch elements per grid step (B is 8-padded)
    out2d, attn_bm = pl.pallas_call(
        _attn_kernel,
        out_shape=(jax.ShapeDtypeStruct((B * T, H), jnp.float32),
                   jax.ShapeDtypeStruct((B, T, S), jnp.float32)),
        grid_spec=pltpu.PrefetchScalarGridSpec(
            num_scalar_prefetch=0,
            grid=(B // BB,),
            in_specs=[
                pl.BlockSpec((BB, 1), lambda b: (b, 0)),            # src lengths
                pl.BlockSpec((BB * T, H), lambda b: (b, 0)),        # decoder states
                pl.BlockSpec((BB, S, H), lambda b: (b, 0, 0)),      # encoder context
                pl.BlockSpec((H, H), lambda b: (0, 0)),             # W_in (resident)
                pl.BlockSpec((H, H), lambda b: (0, 0)),             # W_out_h (resident)
                pl.BlockSpec((H, H), lambda b: (0, 0)),             # W_out_c (resident)
            ],
            out_specs=[
                pl.BlockSpec((BB * T, H), lambda b: (b, 0)),
                pl.BlockSpec((BB, T, S), lambda b: (b, 0, 0)),
            ]),
        compiler_params=pltpu.CompilerParams(
            dimension_semantics=("parallel",),    # megacore / v7x 2-TC batch split
            vmem_limit_bytes=_VMEM_LIMIT),
    )(lengths_col, rnn2d, ctx_bm, w_in, w_out_h, w_out_c)
    return out2d, attn_bm


# ----------------------------------------------------------------------------
# Parameter padding / preparation ((8,128)-aligned, bf16 matmul operands).
# ----------------------------------------------------------------------------
def _pad_axis(x, axis, new_size):
    pad = [(0, 0)] * x.ndim
    pad[axis] = (0, new_size - x.shape[axis])
    return jnp.pad(x, pad)


def _pad_gate_cols(w, h_pad):
    """Pad each fused GRU gate column block (r|z|n) to h_pad lanes."""
    r, z, n = jnp.split(w, 3, axis=-1)
    return jnp.concatenate([_pad_axis(r, -1, h_pad), _pad_axis(z, -1, h_pad),
                            _pad_axis(n, -1, h_pad)], axis=-1)


def _prep_gru_params(w_ih, w_hh, b_ih, b_hh, h_pad):
    w_ih_p = _pad_gate_cols(w_ih, h_pad).astype(jnp.bfloat16)                    # (E,3Hp)
    w_hh_p = _pad_gate_cols(_pad_axis(w_hh, 0, h_pad), h_pad).astype(jnp.bfloat16)
    b_hr, b_hz, b_hn = jnp.split(b_hh, 3, axis=-1)
    # Fold b_hr/b_hz into the hoisted input bias; only b_hn stays inside r*(.).
    b_comb = b_ih + jnp.concatenate([b_hr, b_hz, jnp.zeros_like(b_hn)], axis=-1)
    return (w_ih_p, w_hh_p, _pad_gate_cols(b_comb, h_pad), _pad_axis(b_hn, -1, h_pad))


# ----------------------------------------------------------------------------
# NMTModel.forward equivalent
# ----------------------------------------------------------------------------
def nmt_forward(params, src, tgt, lengths, *, time_tile=None):
    """
    src: (src_len, batch) int32   tgt: (tgt_len, batch) int32   lengths: (batch,)
    Returns (out (tgt_len-1, batch, H), {"std": (tgt_len-1, batch, src_len)},
             dec_state = final decoder GRU hidden (batch, H)).
    """
    tgt = tgt[:-1]                                   # exclude last target token
    S, B = src.shape
    Tm1 = tgt.shape[0]
    E = params["enc_emb"].shape[1]
    H = params["enc_w_hh"].shape[0]

    B_pad = _round_up(B, 8)                          # sublane-aligned batch
    H_pad = _round_up(H, 128)                        # lane-dense hidden
    if time_tile is None:
        time_tile = _pick_time_tile(max(S, Tm1), B_pad, E, H_pad)
    S_pad = _round_up(S, time_tile)
    T_pad = _round_up(Tm1, time_tile)

    lengths = lengths.astype(jnp.int32)
    lengths_col = jnp.pad(lengths.reshape(B, 1), ((0, B_pad - B), (0, 0)))

    enc_w_ih, enc_w_hh, enc_b, enc_bhn = _prep_gru_params(
        params["enc_w_ih"], params["enc_w_hh"], params["enc_b_ih"],
        params["enc_b_hh"], H_pad)
    dec_w_ih, dec_w_hh, dec_b, dec_bhn = _prep_gru_params(
        params["dec_w_ih"], params["dec_w_hh"], params["dec_b_ih"],
        params["dec_b_hh"], H_pad)
    w_in = _pad_axis(_pad_axis(params["attn_w_in"], 0, H_pad), 1, H_pad).astype(jnp.bfloat16)
    w_out_h = _pad_axis(_pad_axis(params["attn_w_out_h"], 0, H_pad), 1, H_pad).astype(jnp.bfloat16)
    w_out_c = _pad_axis(_pad_axis(params["attn_w_out_c"], 0, H_pad), 1, H_pad).astype(jnp.bfloat16)

    # --- encoder: Embedding + masked GRU (pack/pad_packed semantics) ---
    src_emb = jnp.take(params["enc_emb"], src, axis=0)                   # (S, B, E)
    src_emb = jnp.pad(src_emb, ((0, S_pad - S), (0, B_pad - B), (0, 0)))
    src_x2d = src_emb.reshape(S_pad * B_pad, E).astype(jnp.bfloat16)
    h0 = jnp.zeros((B_pad, H_pad), jnp.float32)
    ctx2d, enc_hidden = gru_forward(src_x2d, lengths_col, h0,
                                    enc_w_ih, enc_w_hh, enc_b, enc_bhn,
                                    masked=True, seq_len=S, padded_len=S_pad,
                                    time_tile=time_tile)
    context = ctx2d.reshape(S_pad, B_pad, H_pad)                         # time-major bf16

    # --- decoder RNN (init_decoder_state: GRU hidden = enc_hidden) ---
    tgt_emb = jnp.take(params["dec_emb"], tgt, axis=0)                   # (Tm1, B, E)
    tgt_emb = jnp.pad(tgt_emb, ((0, T_pad - Tm1), (0, B_pad - B), (0, 0)))
    tgt_x2d = tgt_emb.reshape(T_pad * B_pad, E).astype(jnp.bfloat16)
    rnn2d, dec_hidden = gru_forward(tgt_x2d, lengths_col, enc_hidden,
                                    dec_w_ih, dec_w_hh, dec_b, dec_bhn,
                                    masked=False, seq_len=Tm1, padded_len=T_pad,
                                    time_tile=time_tile)
    rnn_out = rnn2d.reshape(T_pad, B_pad, H_pad)

    # --- global attention ("general"): projections computed in-kernel ---
    # TODO(synk): batch-major outputs would remove these wrapper transposes entirely.
    rnn_bm2d = jnp.transpose(rnn_out, (1, 0, 2)).reshape(B_pad * T_pad, H_pad)
    ctx_bm = jnp.transpose(context, (1, 0, 2))                           # (B, S, H) bf16
    out2d, attn_bm = attention_forward(rnn_bm2d, ctx_bm, lengths_col,
                                       w_in, w_out_h, w_out_c)

    out = jnp.transpose(out2d.reshape(B_pad, T_pad, H_pad), (1, 0, 2))[:Tm1, :B, :H]
    attn = jnp.transpose(attn_bm, (1, 0, 2))[:Tm1, :B, :S]
    dec_state = dec_hidden[:B, :H]
    return out, {"std": attn}, dec_state


def init_params(key, vocab_src, vocab_tgt, emb, hidden):
    def nrm(k, shape):
        return 0.1 * jax.random.normal(k, shape, jnp.float32)
    ks = jax.random.split(key, 13)
    G = 3 * hidden                                  # fused gates (r|z|n)
    return dict(
        enc_emb=nrm(ks[0], (vocab_src, emb)),
        dec_emb=nrm(ks[1], (vocab_tgt, emb)),
        enc_w_ih=nrm(ks[2], (emb, G)),
        enc_w_hh=nrm(ks[3], (hidden, G)),
        enc_b_ih=nrm(ks[4], (1, G)),
        enc_b_hh=nrm(ks[5], (1, G)),
        dec_w_ih=nrm(ks[6], (emb, G)),
        dec_w_hh=nrm(ks[7], (hidden, G)),
        dec_b_ih=nrm(ks[8], (1, G)),
        dec_b_hh=nrm(ks[9], (1, G)),
        attn_w_in=nrm(ks[10], (hidden, hidden)),    # GlobalAttention.linear_in
        attn_w_out_c=nrm(ks[11], (hidden, hidden)), # linear_out, c-part
        attn_w_out_h=nrm(ks[12], (hidden, hidden)), # linear_out, h-part
    )


if __name__ == "__main__":
    S, T_full, B, E, H = 16, 6, 4, 32, 32
    V_SRC, V_TGT = 50, 60

    key = jax.random.PRNGKey(0)
    k_param, k_src, k_tgt = jax.random.split(key, 3)

    params = init_params(k_param, V_SRC, V_TGT, E, H)
    src = jax.random.randint(k_src, (S, B), 0, V_SRC, dtype=jnp.int32)
    tgt = jax.random.randint(k_tgt, (T_full, B), 0, V_TGT, dtype=jnp.int32)
    lengths = jnp.array([16, 11, 7, 3], dtype=jnp.int32)   # src lengths, pre-padding

    # time_tile=8 -> encoder runs as 2 pipelined chunks (exercises the VMEM h-carry).
    out, attns, dec_state = nmt_forward(params, src, tgt, lengths, time_tile=8)
    out = jax.block_until_ready(out)
    attn_std = jax.block_until_ready(attns["std"])
    dec_state = jax.block_until_ready(dec_state)

    assert out.shape == (T_full - 1, B, H)
    assert attn_std.shape == (T_full - 1, B, S)
    assert dec_state.shape == (B, H)
    assert bool(jnp.all(jnp.isfinite(out)))
    assert bool(jnp.all(jnp.isfinite(dec_state)))
    # exact-reciprocal softmax: attention rows sum to 1
    assert bool(jnp.allclose(jnp.sum(attn_std, axis=-1), 1.0, atol=1e-3))

    print("KERNEL_OK")
</pallas_src>

<mosaic_0001>
module attributes {stable_mosaic.version = 11 : i64} {
  func.func @_gru_kernel(%arg0: i32, %arg1: memref<8x1xi32, #tpu.memory_space<vmem>>, %arg2: memref<8x128xf32, #tpu.memory_space<vmem>>, %arg3: memref<64x32xbf16, #tpu.memory_space<vmem>>, %arg4: memref<32x384xbf16, #tpu.memory_space<vmem>>, %arg5: memref<128x384xbf16, #tpu.memory_space<vmem>>, %arg6: memref<1x384xf32, #tpu.memory_space<vmem>>, %arg7: memref<1x128xf32, #tpu.memory_space<vmem>>, %arg8: memref<64x128xbf16, #tpu.memory_space<vmem>>, %arg9: memref<8x128xf32, #tpu.memory_space<vmem>>, %arg10: memref<8x128xf32, #tpu.memory_space<vmem>>) attributes {dimension_semantics = [#tpu.dimension_semantics<arbitrary>], iteration_bounds = array<i64: 2>, scalar_prefetch = 0 : i64, scratch_operands = 1 : i64, tpu.core_type = #tpu.core_type<tc>, window_params = [{pipeline_mode = #tpu.pipeline_mode<synchronous>, transform_indices = @transform_0, window_bounds = array<i64: 8, 1>}, {pipeline_mode = #tpu.pipeline_mode<synchronous>, transform_indices = @transform_1, window_bounds = array<i64: 8, 128>}, {transform_indices = @transform_2, window_bounds = array<i64: 64, 32>}, {pipeline_mode = #tpu.pipeline_mode<synchronous>, transform_indices = @transform_3, window_bounds = array<i64: 32, 384>}, {pipeline_mode = #tpu.pipeline_mode<synchronous>, transform_indices = @transform_4, window_bounds = array<i64: 128, 384>}, {pipeline_mode = #tpu.pipeline_mode<synchronous>, transform_indices = @transform_5, window_bounds = array<i64: 1, 384>}, {pipeline_mode = #tpu.pipeline_mode<synchronous>, transform_indices = @transform_6, window_bounds = array<i64: 1, 128>}, {transform_indices = @transform_7, window_bounds = array<i64: 64, 128>}, {pipeline_mode = #tpu.pipeline_mode<synchronous>, transform_indices = @transform_8, window_bounds = array<i64: 8, 128>}]} {
    %c0_i32 = arith.constant 0 : i32
    %0 = arith.cmpi eq, %arg0, %c0_i32 : i32
    %1 = arith.extui %0 : i1 to i32
    %c0_i32_0 = arith.constant 0 : i32
    %2 = arith.cmpi ne, %1, %c0_i32_0 : i32
    scf.if %2 {
      %c0_68 = arith.constant 0 : index
      %c0_69 = arith.constant 0 : index
      %362 = vector.load %arg2[%c0_68, %c0_69] : memref<8x128xf32, #tpu.memory_space<vmem>>, vector<8x128xf32>
      %c0_70 = arith.constant 0 : index
      %c0_71 = arith.constant 0 : index
      %363 = vector.load %arg10[%c0_70, %c0_71] : memref<8x128xf32, #tpu.memory_space<vmem>>, vector<8x128xf32>
      tpu.vector_store %arg10[%c0_70, %c0_71], %362 {strides = array<i32>} : memref<8x128xf32, #tpu.memory_space<vmem>>, vector<8x128xf32>,
    } else {
    }
    %c0 = arith.constant 0 : index
    %c0_1 = arith.constant 0 : index
    %3 = vector.load %arg4[%c0, %c0_1] : memref<32x384xbf16, #tpu.memory_space<vmem>>, vector<32x384xbf16>
    %c0_2 = arith.constant 0 : index
    %c0_3 = arith.constant 0 : index
    %4 = vector.load %arg5[%c0_2, %c0_3] : memref<128x384xbf16, #tpu.memory_space<vmem>>, vector<128x384xbf16>
    %c0_4 = arith.constant 0 : index
    %c0_5 = arith.constant 0 : index
    %5 = vector.load %arg6[%c0_4, %c0_5] : memref<1x384xf32, #tpu.memory_space<vmem>>, vector<1x384xf32>
    %c0_6 = arith.constant 0 : index
    %c0_7 = arith.constant 0 : index
    %6 = vector.load %arg7[%c0_6, %c0_7] : memref<1x128xf32, #tpu.memory_space<vmem>>, vector<1x128xf32>
    %c0_8 = arith.constant 0 : index
    %c0_9 = arith.constant 0 : index
    %7 = vector.load %arg3[%c0_8, %c0_9] : memref<64x32xbf16, #tpu.memory_space<vmem>>, vector<64x32xbf16>
    %cst = arith.constant dense<0.000000e+00> : vector<64x384xf32>
    %8 = tpu.matmul %7, %3, %cst {dimension_numbers = #tpu.dot_dimension_numbers<[1], [0], [0], [1], [0, 0, 1, 1], [], []>} : vector<64x32xbf16>, vector<32x384xbf16>, vector<64x384xf32> -> vector<64x384xf32>
    %9 = vector.broadcast %5 : vector<1x384xf32> to vector<64x384xf32>
    %10 = arith.addf %8, %9 : vector<64x384xf32>
    %c0_10 = arith.constant 0 : index
    %c0_11 = arith.constant 0 : index
    %11 = vector.load %arg1[%c0_10, %c0_11] : memref<8x1xi32, #tpu.memory_space<vmem>>, vector<8x1xi32>
    %c8_i32 = arith.constant 8 : i32
    %12 = arith.muli %arg0, %c8_i32 : i32
    %c0_12 = arith.constant 0 : index
    %c0_13 = arith.constant 0 : index
    %13 = vector.load %arg10[%c0_12, %c0_13] : memref<8x128xf32, #tpu.memory_space<vmem>>, vector<8x128xf32>
    %14 = vector.extract_strided_slice %10 {offsets = [0, 0], sizes = [8, 384], strides = [1, 1]} : vector<64x384xf32> to vector<8x384xf32>
    %15 = arith.truncf %13 : vector<8x128xf32> to vector<8x128xbf16>
    %cst_14 = arith.constant dense<0.000000e+00> : vector<8x384xf32>
    %16 = tpu.matmul %15, %4, %cst_14 {dimension_numbers = #tpu.dot_dimension_numbers<[1], [0], [0], [1], [0, 0, 1, 1], [], []>} : vector<8x128xbf16>, vector<128x384xbf16>, vector<8x384xf32> -> vector<8x384xf32>
    %17 = vector.extract_strided_slice %14 {offsets = [0, 0], sizes = [8, 128], strides = [1, 1]} : vector<8x384xf32> to vector<8x128xf32>
    %18 = vector.extract_strided_slice %16 {offsets = [0, 0], sizes = [8, 128], strides = [1, 1]} : vector<8x384xf32> to vector<8x128xf32>
    %19 = arith.addf %17, %18 : vector<8x128xf32>
    %20 = arith.negf %19 : vector<8x128xf32>
    %21 = math.exp %20 : vector<8x128xf32>
    %cst_15 = arith.constant 1.000000e+00 : f32
    %22 = vector.broadcast %cst_15 : f32 to vector<8x128xf32>
    %23 = arith.addf %22, %21 : vector<8x128xf32>
    %24 = arith.divf %22, %23 : vector<8x128xf32>
    %25 = vector.extract_strided_slice %14 {offsets = [0, 128], sizes = [8, 128], strides = [1, 1]} : vector<8x384xf32> to vector<8x128xf32>
    %26 = vector.extract_strided_slice %16 {offsets = [0, 128], sizes = [8, 128], strides = [1, 1]} : vector<8x384xf32> to vector<8x128xf32>
    %27 = arith.addf %25, %26 : vector<8x128xf32>
    %28 = arith.negf %27 : vector<8x128xf32>
    %29 = math.exp %28 : vector<8x128xf32>
    %cst_16 = arith.constant 1.000000e+00 : f32
    %30 = vector.broadcast %cst_16 : f32 to vector<8x128xf32>
    %31 = arith.addf %30, %29 : vector<8x128xf32>
    %32 = arith.divf %30, %31 : vector<8x128xf32>
    %33 = vector.extract_strided_slice %14 {offsets = [0, 256], sizes = [8, 128], strides = [1, 1]} : vector<8x384xf32> to vector<8x128xf32>
    %34 = vector.extract_strided_slice %16 {offsets = [0, 256], sizes = [8, 128], strides = [1, 1]} : vector<8x384xf32> to vector<8x128xf32>
    %35 = vector.broadcast %6 : vector<1x128xf32> to vector<8x128xf32>
    %36 = arith.addf %34, %35 : vector<8x128xf32>
    %37 = arith.mulf %24, %36 : vector<8x128xf32>
    %38 = arith.addf %33, %37 : vector<8x128xf32>
    %39 = math.tanh %38 : vector<8x128xf32>
    %cst_17 = arith.constant 1.000000e+00 : f32
    %40 = vector.broadcast %cst_17 : f32 to vector<8x128xf32>
    %41 = arith.subf %40, %32 : vector<8x128xf32>
    %42 = arith.mulf %41, %39 : vector<8x128xf32>
    %43 = arith.mulf %32, %13 : vector<8x128xf32>
    %44 = arith.addf %42, %43 : vector<8x128xf32>
    %c0_i32_18 = arith.constant 0 : i32
    %45 = arith.addi %12, %c0_i32_18 : i32
    %46 = vector.broadcast %45 : i32 to vector<8x1xi32>
    %47 = arith.cmpi slt, %46, %11 : vector<8x1xi32>
    %48 = vector.shape_cast %47 : vector<8x1xi1> to vector<8x1xi1>
    %49 = vector.broadcast %48 : vector<8x1xi1> to vector<8x128xi1>
    %50 = arith.select %49, %44, %13 : vector<8x128xi1>, vector<8x128xf32>
    %cst_19 = arith.constant 0.000000e+00 : f32
    %51 = vector.shape_cast %47 : vector<8x1xi1> to vector<8x1xi1>
    %52 = vector.broadcast %51 : vector<8x1xi1> to vector<8x128xi1>
    %53 = vector.broadcast %cst_19 : f32 to vector<8x128xf32>
    %54 = arith.select %52, %50, %53 : vector<8x128xi1>, vector<8x128xf32>
    %55 = arith.truncf %54 : vector<8x128xf32> to vector<8x128xbf16>
    %c0_20 = arith.constant 0 : index
    %c0_21 = arith.constant 0 : index
    %56 = vector.load %arg8[%c0_20, %c0_21] : memref<64x128xbf16, #tpu.memory_space<vmem>>, vector<8x128xbf16>
    tpu.vector_store %arg8[%c0_20, %c0_21], %55 {strides = array<i32>} : memref<64x128xbf16, #tpu.memory_space<vmem>>, vector<8x128xbf16>,
    %57 = vector.extract_strided_slice %10 {offsets = [8, 0], sizes = [8, 384], strides = [1, 1]} : vector<64x384xf32> to vector<8x384xf32>
    %58 = arith.truncf %50 : vector<8x128xf32> to vector<8x128xbf16>
    %cst_22 = arith.constant dense<0.000000e+00> : vector<8x384xf32>
    %59 = tpu.matmul %58, %4, %cst_22 {dimension_numbers = #tpu.dot_dimension_numbers<[1], [0], [0], [1], [0, 0, 1, 1], [], []>} : vector<8x128xbf16>, vector<128x384xbf16>, vector<8x384xf32> -> vector<8x384xf32>
    %60 = vector.extract_strided_slice %57 {offsets = [0, 0], sizes = [8, 128], strides = [1, 1]} : vector<8x384xf32> to vector<8x128xf32>
    %61 = vector.extract_strided_slice %59 {offsets = [0, 0], sizes = [8, 128], strides = [1, 1]} : vector<8x384xf32> to vector<8x128xf32>
    %62 = arith.addf %60, %61 : vector<8x128xf32>
    %63 = arith.negf %62 : vector<8x128xf32>
    %64 = math.exp %63 : vector<8x128xf32>
    %cst_23 = arith.constant 1.000000e+00 : f32
    %65 = vector.broadcast %cst_23 : f32 to vector<8x128xf32>
    %66 = arith.addf %65, %64 : vector<8x128xf32>
    %67 = arith.divf %65, %66 : vector<8x128xf32>
    %68 = vector.extract_strided_slice %57 {offsets = [0, 128], sizes = [8, 128], strides = [1, 1]} : vector<8x384xf32> to vector<8x128xf32>
    %69 = vector.extract_strided_slice %59 {offsets = [0, 128], sizes = [8, 128], strides = [1, 1]} : vector<8x384xf32> to vector<8x128xf32>
    %70 = arith.addf %68, %69 : vector<8x128xf32>
    %71 = arith.negf %70 : vector<8x128xf32>
    %72 = math.exp %71 : vector<8x128xf32>
    %cst_24 = arith.constant 1.000000e+00 : f32
    %73 = vector.broadcast %cst_24 : f32 to vector<8x128xf32>
    %74 = arith.addf %73, %72 : vector<8x128xf32>
    %75 = arith.divf %73, %74 : vector<8x128xf32>
    %76 = vector.extract_strided_slice %57 {offsets = [0, 256], sizes = [8, 128], strides = [1, 1]} : vector<8x384xf32> to vector<8x128xf32>
    %77 = vector.extract_strided_slice %59 {offsets = [0, 256], sizes = [8, 128], strides = [1, 1]} : vector<8x384xf32> to vector<8x128xf32>
    %78 = vector.broadcast %6 : vector<1x128xf32> to vector<8x128xf32>
    %79 = arith.addf %77, %78 : vector<8x128xf32>
    %80 = arith.mulf %67, %79 : vector<8x128xf32>
    %81 = arith.addf %76, %80 : vector<8x128xf32>
    %82 = math.tanh %81 : vector<8x128xf32>
    %cst_25 = arith.constant 1.000000e+00 : f32
    %83 = vector.broadcast %cst_25 : f32 to vector<8x128xf32>
    %84 = arith.subf %83, %75 : vector<8x128xf32>
    %85 = arith.mulf %84, %82 : vector<8x128xf32>
    %86 = arith.mulf %75, %50 : vector<8x128xf32>
    %87 = arith.addf %85, %86 : vector<8x128xf32>
    %c1_i32 = arith.constant 1 : i32
    %88 = arith.addi %12, %c1_i32 : i32
    %89 = vector.broadcast %88 : i32 to vector<8x1xi32>
    %90 = arith.cmpi slt, %89, %11 : vector<8x1xi32>
    %91 = vector.shape_cast %90 : vector<8x1xi1> to vector<8x1xi1>
    %92 = vector.broadcast %91 : vector<8x1xi1> to vector<8x128xi1>
    %93 = arith.select %92, %87, %50 : vector<8x128xi1>, vector<8x128xf32>
    %cst_26 = arith.constant 0.000000e+00 : f32
    %94 = vector.shape_cast %90 : vector<8x1xi1> to vector<8x1xi1>
    %95 = vector.broadcast %94 : vector<8x1xi1> to vector<8x128xi1>
    %96 = vector.broadcast %cst_26 : f32 to vector<8x128xf32>
    %97 = arith.select %95, %93, %96 : vector<8x128xi1>, vector<8x128xf32>
    %98 = arith.truncf %97 : vector<8x128xf32> to vector<8x128xbf16>
    %c8 = arith.constant 8 : index
    %c0_27 = arith.constant 0 : index
    %99 = vector.load %arg8[%c8, %c0_27] : memref<64x128xbf16, #tpu.memory_space<vmem>>, vector<8x128xbf16>
    tpu.vector_store %arg8[%c8, %c0_27], %98 {strides = array<i32>} : memref<64x128xbf16, #tpu.memory_space<vmem>>, vector<8x128xbf16>,
    %100 = vector.extract_strided_slice %10 {offsets = [16, 0], sizes = [8, 384], strides = [1, 1]} : vector<64x384xf32> to vector<8x384xf32>
    %101 = arith.truncf %93 : vector<8x128xf32> to vector<8x128xbf16>
    %cst_28 = arith.constant dense<0.000000e+00> : vector<8x384xf32>
    %102 = tpu.matmul %101, %4, %cst_28 {dimension_numbers = #tpu.dot_dimension_numbers<[1], [0], [0], [1], [0, 0, 1, 1], [], []>} : vector<8x128xbf16>, vector<128x384xbf16>, vector<8x384xf32> -> vector<8x384xf32>
    %103 = vector.extract_strided_slice %100 {offsets = [0, 0], sizes = [8, 128], strides = [1, 1]} : vector<8x384xf32> to vector<8x128xf32>
    %104 = vector.extract_strided_slice %102 {offsets = [0, 0], sizes = [8, 128], strides = [1, 1]} : vector<8x384xf32> to vector<8x128xf32>
    %105 = arith.addf %103, %104 : vector<8x128xf32>
    %106 = arith.negf %105 : vector<8x128xf32>
    %107 = math.exp %106 : vector<8x128xf32>
    %cst_29 = arith.constant 1.000000e+00 : f32
    %108 = vector.broadcast %cst_29 : f32 to vector<8x128xf32>
    %109 = arith.addf %108, %107 : vector<8x128xf32>
    %110 = arith.divf %108, %109 : vector<8x128xf32>
    %111 = vector.extract_strided_slice %100 {offsets = [0, 128], sizes = [8, 128], strides = [1, 1]} : vector<8x384xf32> to vector<8x128xf32>
    %112 = vector.extract_strided_slice %102 {offsets = [0, 128], sizes = [8, 128], strides = [1, 1]} : vector<8x384xf32> to vector<8x128xf32>
    %113 = arith.addf %111, %112 : vector<8x128xf32>
    %114 = arith.negf %113 : vector<8x128xf32>
    %115 = math.exp %114 : vector<8x128xf32>
    %cst_30 = arith.constant 1.000000e+00 : f32
    %116 = vector.broadcast %cst_30 : f32 to vector<8x128xf32>
    %117 = arith.addf %116, %115 : vector<8x128xf32>
    %118 = arith.divf %116, %117 : vector<8x128xf32>
    %119 = vector.extract_strided_slice %100 {offsets = [0, 256], sizes = [8, 128], strides = [1, 1]} : vector<8x384xf32> to vector<8x128xf32>
    %120 = vector.extract_strided_slice %102 {offsets = [0, 256], sizes = [8, 128], strides = [1, 1]} : vector<8x384xf32> to vector<8x128xf32>
    %121 = vector.broadcast %6 : vector<1x128xf32> to vector<8x128xf32>
    %122 = arith.addf %120, %121 : vector<8x128xf32>
    %123 = arith.mulf %110, %122 : vector<8x128xf32>
    %124 = arith.addf %119, %123 : vector<8x128xf32>
    %125 = math.tanh %124 : vector<8x128xf32>
    %cst_31 = arith.constant 1.000000e+00 : f32
    %126 = vector.broadcast %cst_31 : f32 to vector<8x128xf32>
    %127 = arith.subf %126, %118 : vector<8x128xf32>
    %128 = arith.mulf %127, %125 : vector<8x128xf32>
    %129 = arith.mulf %118, %93 : vector<8x128xf32>
    %130 = arith.addf %128, %129 : vector<8x128xf32>
    %c2_i32 = arith.constant 2 : i32
    %131 = arith.addi %12, %c2_i32 : i32
    %132 = vector.broadcast %131 : i32 to vector<8x1xi32>
    %133 = arith.cmpi slt, %132, %11 : vector<8x1xi32>
    %134 = vector.shape_cast %133 : vector<8x1xi1> to vector<8x1xi1>
    %135 = vector.broadcast %134 : vector<8x1xi1> to vector<8x128xi1>
    %136 = arith.select %135, %130, %93 : vector<8x128xi1>, vector<8x128xf32>
    %cst_32 = arith.constant 0.000000e+00 : f32
    %137 = vector.shape_cast %133 : vector<8x1xi1> to vector<8x1xi1>
    %138 = vector.broadcast %137 : vector<8x1xi1> to vector<8x128xi1>
    %139 = vector.broadcast %cst_32 : f32 to vector<8x128xf32>
    %140 = arith.select %138, %136, %139 : vector<8x128xi1>, vector<8x128xf32>
    %141 = arith.truncf %140 : vector<8x128xf32> to vector<8x128xbf16>
    %c16 = arith.constant 16 : index
    %c0_33 = arith.constant 0 : index
    %142 = vector.load %arg8[%c16, %c0_33] : memref<64x128xbf16, #tpu.memory_space<vmem>>, vector<8x128xbf16>
    tpu.vector_store %arg8[%c16, %c0_33], %141 {strides = array<i32>} : memref<64x128xbf16, #tpu.memory_space<vmem>>, vector<8x128xbf16>,
    %143 = vector.extract_strided_slice %10 {offsets = [24, 0], sizes = [8, 384], strides = [1, 1]} : vector<64x384xf32> to vector<8x384xf32>
    %144 = arith.truncf %136 : vector<8x128xf32> to vector<8x128xbf16>
    %cst_34 = arith.constant dense<0.000000e+00> : vector<8x384xf32>
    %145 = tpu.matmul %144, %4, %cst_34 {dimension_numbers = #tpu.dot_dimension_numbers<[1], [0], [0], [1], [0, 0, 1, 1], [], []>} : vector<8x128xbf16>, vector<128x384xbf16>, vector<8x384xf32> -> vector<8x384xf32>
    %146 = vector.extract_strided_slice %143 {offsets = [0, 0], sizes = [8, 128], strides = [1, 1]} : vector<8x384xf32> to vector<8x128xf32>
    %147 = vector.extract_strided_slice %145 {offsets = [0, 0], sizes = [8, 128], strides = [1, 1]} : vector<8x384xf32> to vector<8x128xf32>
    %148 = arith.addf %146, %147 : vector<8x128xf32>
    %149 = arith.negf %148 : vector<8x128xf32>
    %150 = math.exp %149 : vector<8x128xf32>
    %cst_35 = arith.constant 1.000000e+00 : f32
    %151 = vector.broadcast %cst_35 : f32 to vector<8x128xf32>
    %152 = arith.addf %151, %150 : vector<8x128xf32>
    %153 = arith.divf %151, %152 : vector<8x128xf32>
    %154 = vector.extract_strided_slice %143 {offsets = [0, 128], sizes = [8, 128], strides = [1, 1]} : vector<8x384xf32> to vector<8x128xf32>
    %155 = vector.extract_strided_slice %145 {offsets = [0, 128], sizes = [8, 128], strides = [1, 1]} : vector<8x384xf32> to vector<8x128xf32>
    %156 = arith.addf %154, %155 : vector<8x128xf32>
    %157 = arith.negf %156 : vector<8x128xf32>
    %158 = math.exp %157 : vector<8x128xf32>
    %cst_36 = arith.constant 1.000000e+00 : f32
    %159 = vector.broadcast %cst_36 : f32 to vector<8x128xf32>
    %160 = arith.addf %159, %158 : vector<8x128xf32>
    %161 = arith.divf %159, %160 : vector<8x128xf32>
    %162 = vector.extract_strided_slice %143 {offsets = [0, 256], sizes = [8, 128], strides = [1, 1]} : vector<8x384xf32> to vector<8x128xf32>
    %163 = vector.extract_strided_slice %145 {offsets = [0, 256], sizes = [8, 128], strides = [1, 1]} : vector<8x384xf32> to vector<8x128xf32>
    %164 = vector.broadcast %6 : vector<1x128xf32> to vector<8x128xf32>
    %165 = arith.addf %163, %164 : vector<8x128xf32>
    %166 = arith.mulf %153, %165 : vector<8x128xf32>
    %167 = arith.addf %162, %166 : vector<8x128xf32>
    %168 = math.tanh %167 : vector<8x128xf32>
    %cst_37 = arith.constant 1.000000e+00 : f32
    %169 = vector.broadcast %cst_37 : f32 to vector<8x128xf32>
    %170 = arith.subf %169, %161 : vector<8x128xf32>
    %171 = arith.mulf %170, %168 : vector<8x128xf32>
    %172 = arith.mulf %161, %136 : vector<8x128xf32>
    %173 = arith.addf %171, %172 : vector<8x128xf32>
    %c3_i32 = arith.constant 3 : i32
    %174 = arith.addi %12, %c3_i32 : i32
    %175 = vector.broadcast %174 : i32 to vector<8x1xi32>
    %176 = arith.cmpi slt, %175, %11 : vector<8x1xi32>
    %177 = vector.shape_cast %176 : vector<8x1xi1> to vector<8x1xi1>
    %178 = vector.broadcast %177 : vector<8x1xi1> to vector<8x128xi1>
    %179 = arith.select %178, %173, %136 : vector<8x128xi1>, vector<8x128xf32>
    %cst_38 = arith.constant 0.000000e+00 : f32
    %180 = vector.shape_cast %176 : vector<8x1xi1> to vector<8x1xi1>
    %181 = vector.broadcast %180 : vector<8x1xi1> to vector<8x128xi1>
    %182 = vector.broadcast %cst_38 : f32 to vector<8x128xf32>
    %183 = arith.select %181, %179, %182 : vector<8x128xi1>, vector<8x128xf32>
    %184 = arith.truncf %183 : vector<8x128xf32> to vector<8x128xbf16>
    %c24 = arith.constant 24 : index
    %c0_39 = arith.constant 0 : index
    %185 = vector.load %arg8[%c24, %c0_39] : memref<64x128xbf16, #tpu.memory_space<vmem>>, vector<8x128xbf16>
    tpu.vector_store %arg8[%c24, %c0_39], %184 {strides = array<i32>} : memref<64x128xbf16, #tpu.memory_space<vmem>>, vector<8x128xbf16>,
    %186 = vector.extract_strided_slice %10 {offsets = [32, 0], sizes = [8, 384], strides = [1, 1]} : vector<64x384xf32> to vector<8x384xf32>
    %187 = arith.truncf %179 : vector<8x128xf32> to vector<8x128xbf16>
    %cst_40 = arith.constant dense<0.000000e+00> : vector<8x384xf32>
    %188 = tpu.matmul %187, %4, %cst_40 {dimension_numbers = #tpu.dot_dimension_numbers<[1], [0], [0], [1], [0, 0, 1, 1], [], []>} : vector<8x128xbf16>, vector<128x384xbf16>, vector<8x384xf32> -> vector<8x384xf32>
    %189 = vector.extract_strided_slice %186 {offsets = [0, 0], sizes = [8, 128], strides = [1, 1]} : vector<8x384xf32> to vector<8x128xf32>
    %190 = vector.extract_strided_slice %188 {offsets = [0, 0], sizes = [8, 128], strides = [1, 1]} : vector<8x384xf32> to vector<8x128xf32>
    %191 = arith.addf %189, %190 : vector<8x128xf32>
    %192 = arith.negf %191 : vector<8x128xf32>
    %193 = math.exp %192 : vector<8x128xf32>
    %cst_41 = arith.constant 1.000000e+00 : f32
    %194 = vector.broadcast %cst_41 : f32 to vector<8x128xf32>
    %195 = arith.addf %194, %193 : vector<8x128xf32>
    %196 = arith.divf %194, %195 : vector<8x128xf32>
    %197 = vector.extract_strided_slice %186 {offsets = [0, 128], sizes = [8, 128], strides = [1, 1]} : vector<8x384xf32> to vector<8x128xf32>
    %198 = vector.extract_strided_slice %188 {offsets = [0, 128], sizes = [8, 128], strides = [1, 1]} : vector<8x384xf32> to vector<8x128xf32>
    %199 = arith.addf %197, %198 : vector<8x128xf32>
    %200 = arith.negf %199 : vector<8x128xf32>
    %201 = math.exp %200 : vector<8x128xf32>
    %cst_42 = arith.constant 1.000000e+00 : f32
    %202 = vector.broadcast %cst_42 : f32 to vector<8x128xf32>
    %203 = arith.addf %202, %201 : vector<8x128xf32>
    %204 = arith.divf %202, %203 : vector<8x128xf32>
    %205 = vector.extract_strided_slice %186 {offsets = [0, 256], sizes = [8, 128], strides = [1, 1]} : vector<8x384xf32> to vector<8x128xf32>
    %206 = vector.extract_strided_slice %188 {offsets = [0, 256], sizes = [8, 128], strides = [1, 1]} : vector<8x384xf32> to vector<8x128xf32>
    %207 = vector.broadcast %6 : vector<1x128xf32> to vector<8x128xf32>
    %208 = arith.addf %206, %207 : vector<8x128xf32>
    %209 = arith.mulf %196, %208 : vector<8x128xf32>
    %210 = arith.addf %205, %209 : vector<8x128xf32>
    %211 = math.tanh %210 : vector<8x128xf32>
    %cst_43 = arith.constant 1.000000e+00 : f32
    %212 = vector.broadcast %cst_43 : f32 to vector<8x128xf32>
    %213 = arith.subf %212, %204 : vector<8x128xf32>
    %214 = arith.mulf %213, %211 : vector<8x128xf32>
    %215 = arith.mulf %204, %179 : vector<8x128xf32>
    %216 = arith.addf %214, %215 : vector<8x128xf32>
    %c4_i32 = arith.constant 4 : i32
    %217 = arith.addi %12, %c4_i32 : i32
    %218 = vector.broadcast %217 : i32 to vector<8x1xi32>
    %219 = arith.cmpi slt, %218, %11 : vector<8x1xi32>
    %220 = vector.shape_cast %219 : vector<8x1xi1> to vector<8x1xi1>
    %221 = vector.broadcast %220 : vector<8x1xi1> to vector<8x128xi1>
    %222 = arith.select %221, %216, %179 : vector<8x128xi1>, vector<8x128xf32>
    %cst_44 = arith.constant 0.000000e+00 : f32
    %223 = vector.shape_cast %219 : vector<8x1xi1> to vector<8x1xi1>
    %224 = vector.broadcast %223 : vector<8x1xi1> to vector<8x128xi1>
    %225 = vector.broadcast %cst_44 : f32 to vector<8x128xf32>
    %226 = arith.select %224, %222, %225 : vector<8x128xi1>, vector<8x128xf32>
    %227 = arith.truncf %226 : vector<8x128xf32> to vector<8x128xbf16>
    %c32 = arith.constant 32 : index
    %c0_45 = arith.constant 0 : index
    %228 = vector.load %arg8[%c32, %c0_45] : memref<64x128xbf16, #tpu.memory_space<vmem>>, vector<8x128xbf16>
    tpu.vector_store %arg8[%c32, %c0_45], %227 {strides = array<i32>} : memref<64x128xbf16, #tpu.memory_space<vmem>>, vector<8x128xbf16>,
    %229 = vector.extract_strided_slice %10 {offsets = [40, 0], sizes = [8, 384], strides = [1, 1]} : vector<64x384xf32> to vector<8x384xf32>
    %230 = arith.truncf %222 : vector<8x128xf32> to vector<8x128xbf16>
    %cst_46 = arith.constant dense<0.000000e+00> : vector<8x384xf32>
    %231 = tpu.matmul %230, %4, %cst_46 {dimension_numbers = #tpu.dot_dimension_numbers<[1], [0], [0], [1], [0, 0, 1, 1], [], []>} : vector<8x128xbf16>, vector<128x384xbf16>, vector<8x384xf32> -> vector<8x384xf32>
    %232 = vector.extract_strided_slice %229 {offsets = [0, 0], sizes = [8, 128], strides = [1, 1]} : vector<8x384xf32> to vector<8x128xf32>
    %233 = vector.extract_strided_slice %231 {offsets = [0, 0], sizes = [8, 128], strides = [1, 1]} : vector<8x384xf32> to vector<8x128xf32>
    %234 = arith.addf %232, %233 : vector<8x128xf32>
    %235 = arith.negf %234 : vector<8x128xf32>
    %236 = math.exp %235 : vector<8x128xf32>
    %cst_47 = arith.constant 1.000000e+00 : f32
    %237 = vector.broadcast %cst_47 : f32 to vector<8x128xf32>
    %238 = arith.addf %237, %236 : vector<8x128xf32>
    %239 = arith.divf %237, %238 : vector<8x128xf32>
    %240 = vector.extract_strided_slice %229 {offsets = [0, 128], sizes = [8, 128], strides = [1, 1]} : vector<8x384xf32> to vector<8x128xf32>
    %241 = vector.extract_strided_slice %231 {offsets = [0, 128], sizes = [8, 128], strides = [1, 1]} : vector<8x384xf32> to vector<8x128xf32>
    %242 = arith.addf %240, %241 : vector<8x128xf32>
    %243 = arith.negf %242 : vector<8x128xf32>
    %244 = math.exp %243 : vector<8x128xf32>
    %cst_48 = arith.constant 1.000000e+00 : f32
    %245 = vector.broadcast %cst_48 : f32 to vector<8x128xf32>
    %246 = arith.addf %245, %244 : vector<8x128xf32>
    %247 = arith.divf %245, %246 : vector<8x128xf32>
    %248 = vector.extract_strided_slice %229 {offsets = [0, 256], sizes = [8, 128], strides = [1, 1]} : vector<8x384xf32> to vector<8x128xf32>
    %249 = vector.extract_strided_slice %231 {offsets = [0, 256], sizes = [8, 128], strides = [1, 1]} : vector<8x384xf32> to vector<8x128xf32>
    %250 = vector.broadcast %6 : vector<1x128xf32> to vector<8x128xf32>
    %251 = arith.addf %249, %250 : vector<8x128xf32>
    %252 = arith.mulf %239, %251 : vector<8x128xf32>
    %253 = arith.addf %248, %252 : vector<8x128xf32>
    %254 = math.tanh %253 : vector<8x128xf32>
    %cst_49 = arith.constant 1.000000e+00 : f32
    %255 = vector.broadcast %cst_49 : f32 to vector<8x128xf32>
    %256 = arith.subf %255, %247 : vector<8x128xf32>
    %257 = arith.mulf %256, %254 : vector<8x128xf32>
    %258 = arith.mulf %247, %222 : vector<8x128xf32>
    %259 = arith.addf %257, %258 : vector<8x128xf32>
    %c5_i32 = arith.constant 5 : i32
    %260 = arith.addi %12, %c5_i32 : i32
    %261 = vector.broadcast %260 : i32 to vector<8x1xi32>
    %262 = arith.cmpi slt, %261, %11 : vector<8x1xi32>
    %263 = vector.shape_cast %262 : vector<8x1xi1> to vector<8x1xi1>
    %264 = vector.broadcast %263 : vector<8x1xi1> to vector<8x128xi1>
    %265 = arith.select %264, %259, %222 : vector<8x128xi1>, vector<8x128xf32>
    %cst_50 = arith.constant 0.000000e+00 : f32
    %266 = vector.shape_cast %262 : vector<8x1xi1> to vector<8x1xi1>
    %267 = vector.broadcast %266 : vector<8x1xi1> to vector<8x128xi1>
    %268 = vector.broadcast %cst_50 : f32 to vector<8x128xf32>
    %269 = arith.select %267, %265, %268 : vector<8x128xi1>, vector<8x128xf32>
    %270 = arith.truncf %269 : vector<8x128xf32> to vector<8x128xbf16>
    %c40 = arith.constant 40 : index
    %c0_51 = arith.constant 0 : index
    %271 = vector.load %arg8[%c40, %c0_51] : memref<64x128xbf16, #tpu.memory_space<vmem>>, vector<8x128xbf16>
    tpu.vector_store %arg8[%c40, %c0_51], %270 {strides = array<i32>} : memref<64x128xbf16, #tpu.memory_space<vmem>>, vector<8x128xbf16>,
    %272 = vector.extract_strided_slice %10 {offsets = [48, 0], sizes = [8, 384], strides = [1, 1]} : vector<64x384xf32> to vector<8x384xf32>
    %273 = arith.truncf %265 : vector<8x128xf32> to vector<8x128xbf16>
    %cst_52 = arith.constant dense<0.000000e+00> : vector<8x384xf32>
    %274 = tpu.matmul %273, %4, %cst_52 {dimension_numbers = #tpu.dot_dimension_numbers<[1], [0], [0], [1], [0, 0, 1, 1], [], []>} : vector<8x128xbf16>, vector<128x384xbf16>, vector<8x384xf32> -> vector<8x384xf32>
    %275 = vector.extract_strided_slice %272 {offsets = [0, 0], sizes = [8, 128], strides = [1, 1]} : vector<8x384xf32> to vector<8x128xf32>
    %276 = vector.extract_strided_slice %274 {offsets = [0, 0], sizes = [8, 128], strides = [1, 1]} : vector<8x384xf32> to vector<8x128xf32>
    %277 = arith.addf %275, %276 : vector<8x128xf32>
    %278 = arith.negf %277 : vector<8x128xf32>
    %279 = math.exp %278 : vector<8x128xf32>
    %cst_53 = arith.constant 1.000000e+00 : f32
    %280 = vector.broadcast %cst_53 : f32 to vector<8x128xf32>
    %281 = arith.addf %280, %279 : vector<8x128xf32>
    %282 = arith.divf %280, %281 : vector<8x128xf32>
    %283 = vector.extract_strided_slice %272 {offsets = [0, 128], sizes = [8, 128], strides = [1, 1]} : vector<8x384xf32> to vector<8x128xf32>
    %284 = vector.extract_strided_slice %274 {offsets = [0, 128], sizes = [8, 128], strides = [1, 1]} : vector<8x384xf32> to vector<8x128xf32>
    %285 = arith.addf %283, %284 : vector<8x128xf32>
    %286 = arith.negf %285 : vector<8x128xf32>
    %287 = math.exp %286 : vector<8x128xf32>
    %cst_54 = arith.constant 1.000000e+00 : f32
    %288 = vector.broadcast %cst_54 : f32 to vector<8x128xf32>
    %289 = arith.addf %288, %287 : vector<8x128xf32>
    %290 = arith.divf %288, %289 : vector<8x128xf32>
    %291 = vector.extract_strided_slice %272 {offsets = [0, 256], sizes = [8, 128], strides = [1, 1]} : vector<8x384xf32> to vector<8x128xf32>
    %292 = vector.extract_strided_slice %274 {offsets = [0, 256], sizes = [8, 128], strides = [1, 1]} : vector<8x384xf32> to vector<8x128xf32>
    %293 = vector.broadcast %6 : vector<1x128xf32> to vector<8x128xf32>
    %294 = arith.addf %292, %293 : vector<8x128xf32>
    %295 = arith.mulf %282, %294 : vector<8x128xf32>
    %296 = arith.addf %291, %295 : vector<8x128xf32>
    %297 = math.tanh %296 : vector<8x128xf32>
    %cst_55 = arith.constant 1.000000e+00 : f32
    %298 = vector.broadcast %cst_55 : f32 to vector<8x128xf32>
    %299 = arith.subf %298, %290 : vector<8x128xf32>
    %300 = arith.mulf %299, %297 : vector<8x128xf32>
    %301 = arith.mulf %290, %265 : vector<8x128xf32>
    %302 = arith.addf %300, %301 : vector<8x128xf32>
    %c6_i32 = arith.constant 6 : i32
    %303 = arith.addi %12, %c6_i32 : i32
    %304 = vector.broadcast %303 : i32 to vector<8x1xi32>
    %305 = arith.cmpi slt, %304, %11 : vector<8x1xi32>
    %306 = vector.shape_cast %305 : vector<8x1xi1> to vector<8x1xi1>
    %307 = vector.broadcast %306 : vector<8x1xi1> to vector<8x128xi1>
    %308 = arith.select %307, %302, %265 : vector<8x128xi1>, vector<8x128xf32>
    %cst_56 = arith.constant 0.000000e+00 : f32
    %309 = vector.shape_cast %305 : vector<8x1xi1> to vector<8x1xi1>
    %310 = vector.broadcast %309 : vector<8x1xi1> to vector<8x128xi1>
    %311 = vector.broadcast %cst_56 : f32 to vector<8x128xf32>
    %312 = arith.select %310, %308, %311 : vector<8x128xi1>, vector<8x128xf32>
    %313 = arith.truncf %312 : vector<8x128xf32> to vector<8x128xbf16>
    %c48 = arith.constant 48 : index
    %c0_57 = arith.constant 0 : index
    %314 = vector.load %arg8[%c48, %c0_57] : memref<64x128xbf16, #tpu.memory_space<vmem>>, vector<8x128xbf16>
    tpu.vector_store %arg8[%c48, %c0_57], %313 {strides = array<i32>} : memref<64x128xbf16, #tpu.memory_space<vmem>>, vector<8x128xbf16>,
    %315 = vector.extract_strided_slice %10 {offsets = [56, 0], sizes = [8, 384], strides = [1, 1]} : vector<64x384xf32> to vector<8x384xf32>
    %316 = arith.truncf %308 : vector<8x128xf32> to vector<8x128xbf16>
    %cst_58 = arith.constant dense<0.000000e+00> : vector<8x384xf32>
    %317 = tpu.matmul %316, %4, %cst_58 {dimension_numbers = #tpu.dot_dimension_numbers<[1], [0], [0], [1], [0, 0, 1, 1], [], []>} : vector<8x128xbf16>, vector<128x384xbf16>, vector<8x384xf32> -> vector<8x384xf32>
    %318 = vector.extract_strided_slice %315 {offsets = [0, 0], sizes = [8, 128], strides = [1, 1]} : vector<8x384xf32> to vector<8x128xf32>
    %319 = vector.extract_strided_slice %317 {offsets = [0, 0], sizes = [8, 128], strides = [1, 1]} : vector<8x384xf32> to vector<8x128xf32>
    %320 = arith.addf %318, %319 : vector<8x128xf32>
    %321 = arith.negf %320 : vector<8x128xf32>
    %322 = math.exp %321 : vector<8x128xf32>
    %cst_59 = arith.constant 1.000000e+00 : f32
    %323 = vector.broadcast %cst_59 : f32 to vector<8x128xf32>
    %324 = arith.addf %323, %322 : vector<8x128xf32>
    %325 = arith.divf %323, %324 : vector<8x128xf32>
    %326 = vector.extract_strided_slice %315 {offsets = [0, 128], sizes = [8, 128], strides = [1, 1]} : vector<8x384xf32> to vector<8x128xf32>
    %327 = vector.extract_strided_slice %317 {offsets = [0, 128], sizes = [8, 128], strides = [1, 1]} : vector<8x384xf32> to vector<8x128xf32>
    %328 = arith.addf %326, %327 : vector<8x128xf32>
    %329 = arith.negf %328 : vector<8x128xf32>
    %330 = math.exp %329 : vector<8x128xf32>
    %cst_60 = arith.constant 1.000000e+00 : f32
    %331 = vector.broadcast %cst_60 : f32 to vector<8x128xf32>
    %332 = arith.addf %331, %330 : vector<8x128xf32>
    %333 = arith.divf %331, %332 : vector<8x128xf32>
    %334 = vector.extract_strided_slice %315 {offsets = [0, 256], sizes = [8, 128], strides = [1, 1]} : vector<8x384xf32> to vector<8x128xf32>
    %335 = vector.extract_strided_slice %317 {offsets = [0, 256], sizes = [8, 128], strides = [1, 1]} : vector<8x384xf32> to vector<8x128xf32>
    %336 = vector.broadcast %6 : vector<1x128xf32> to vector<8x128xf32>
    %337 = arith.addf %335, %336 : vector<8x128xf32>
    %338 = arith.mulf %325, %337 : vector<8x128xf32>
    %339 = arith.addf %334, %338 : vector<8x128xf32>
    %340 = math.tanh %339 : vector<8x128xf32>
    %cst_61 = arith.constant 1.000000e+00 : f32
    %341 = vector.broadcast %cst_61 : f32 to vector<8x128xf32>
    %342 = arith.subf %341, %333 : vector<8x128xf32>
    %343 = arith.mulf %342, %340 : vector<8x128xf32>
    %344 = arith.mulf %333, %308 : vector<8x128xf32>
    %345 = arith.addf %343, %344 : vector<8x128xf32>
    %c7_i32 = arith.constant 7 : i32
    %346 = arith.addi %12, %c7_i32 : i32
    %347 = vector.broadcast %346 : i32 to vector<8x1xi32>
    %348 = arith.cmpi slt, %347, %11 : vector<8x1xi32>
    %349 = vector.shape_cast %348 : vector<8x1xi1> to vector<8x1xi1>
    %350 = vector.broadcast %349 : vector<8x1xi1> to vector<8x128xi1>
    %351 = arith.select %350, %345, %308 : vector<8x128xi1>, vector<8x128xf32>
    %cst_62 = arith.constant 0.000000e+00 : f32
    %352 = vector.shape_cast %348 : vector<8x1xi1> to vector<8x1xi1>
    %353 = vector.broadcast %352 : vector<8x1xi1> to vector<8x128xi1>
    %354 = vector.broadcast %cst_62 : f32 to vector<8x128xf32>
    %355 = arith.select %353, %351, %354 : vector<8x128xi1>, vector<8x128xf32>
    %356 = arith.truncf %355 : vector<8x128xf32> to vector<8x128xbf16>
    %c56 = arith.constant 56 : index
    %c0_63 = arith.constant 0 : index
    %357 = vector.load %arg8[%c56, %c0_63] : memref<64x128xbf16, #tpu.memory_space<vmem>>, vector<8x128xbf16>
    tpu.vector_store %arg8[%c56, %c0_63], %356 {strides = array<i32>} : memref<64x128xbf16, #tpu.memory_space<vmem>>, vector<8x128xbf16>,
    %c0_64 = arith.constant 0 : index
    %c0_65 = arith.constant 0 : index
    %358 = vector.load %arg10[%c0_64, %c0_65] : memref<8x128xf32, #tpu.memory_space<vmem>>, vector<8x128xf32>
    tpu.vector_store %arg10[%c0_64, %c0_65], %351 {strides = array<i32>} : memref<8x128xf32, #tpu.memory_space<vmem>>, vector<8x128xf32>,
    %c1_i32_66 = arith.constant 1 : i32
    %359 = arith.cmpi eq, %arg0, %c1_i32_66 : i32
    %360 = arith.extui %359 : i1 to i32
    %c0_i32_67 = arith.constant 0 : i32
    %361 = arith.cmpi ne, %360, %c0_i32_67 : i32
    scf.if %361 {
      %c0_68 = arith.constant 0 : index
      %c0_69 = arith.constant 0 : index
      %362 = vector.load %arg9[%c0_68, %c0_69] : memref<8x128xf32, #tpu.memory_space<vmem>>, vector<8x128xf32>
      tpu.vector_store %arg9[%c0_68, %c0_69], %351 {strides = array<i32>} : memref<8x128xf32, #tpu.memory_space<vmem>>, vector<8x128xf32>,
    } else {
    }
    return
  }
  func.func @transform_0(%arg0: i32) -> (i32, i32) {
    %c0_i32 = arith.constant 0 : i32
    %c0_i32_0 = arith.constant 0 : i32
    %c0_i32_1 = arith.constant 0 : i32
    return %c0_i32, %c0_i32_0 : i32, i32
  }
  func.func @transform_1(%arg0: i32) -> (i32, i32) {
    %c0_i32 = arith.constant 0 : i32
    %c0_i32_0 = arith.constant 0 : i32
    %c0_i32_1 = arith.constant 0 : i32
    return %c0_i32, %c0_i32_0 : i32, i32
  }
  func.func @transform_2(%arg0: i32) -> (i32, i32) {
    %c0_i32 = arith.constant 0 : i32
    %c0_i32_0 = arith.constant 0 : i32
    return %arg0, %c0_i32 : i32, i32
  }
  func.func @transform_3(%arg0: i32) -> (i32, i32) {
    %c0_i32 = arith.constant 0 : i32
    %c0_i32_0 = arith.constant 0 : i32
    %c0_i32_1 = arith.constant 0 : i32
    return %c0_i32, %c0_i32_0 : i32, i32
  }
  func.func @transform_4(%arg0: i32) -> (i32, i32) {
    %c0_i32 = arith.constant 0 : i32
    %c0_i32_0 = arith.constant 0 : i32
    %c0_i32_1 = arith.constant 0 : i32
    return %c0_i32, %c0_i32_0 : i32, i32
  }
  func.func @transform_5(%arg0: i32) -> (i32, i32) {
    %c0_i32 = arith.constant 0 : i32
    %c0_i32_0 = arith.constant 0 : i32
    %c0_i32_1 = arith.constant 0 : i32
    return %c0_i32, %c0_i32_0 : i32, i32
  }
  func.func @transform_6(%arg0: i32) -> (i32, i32) {
    %c0_i32 = arith.constant 0 : i32
    %c0_i32_0 = arith.constant 0 : i32
    %c0_i32_1 = arith.constant 0 : i32
    return %c0_i32, %c0_i32_0 : i32, i32
  }
  func.func @transform_7(%arg0: i32) -> (i32, i32) {
    %c0_i32 = arith.constant 0 : i32
    %c0_i32_0 = arith.constant 0 : i32
    return %arg0, %c0_i32 : i32, i32
  }
  func.func @transform_8(%arg0: i32) -> (i32, i32) {
    %c0_i32 = arith.constant 0 : i32
    %c0_i32_0 = arith.constant 0 : i32
    %c0_i32_1 = arith.constant 0 : i32
    return %c0_i32, %c0_i32_0 : i32, i32
  }
}

</mosaic_0001>

<llo_original>
// kernel: tpu_custom_call.1
$region0: #{tpu_custom_call.1}
  #allocation0 [shape = 'u32[]', space=smem, size = 0x4, offset = 0x4, fixed_abs, tag = 'smem constant byte address 0x4 - core index']
  #allocation1 [shape = 'u32[144,128]{1,0:T(1,128)}', space=vmem, size = 0x12000, scoped, tag = 'internal scratch']
  #allocation2 [shape = 'f32[8,128]{1,0:T(8,128)}', space=vmem, size = 0x1000, scoped, tag = 'scratch operand']
  %s0 = inlined_call_operand.vmem [shape: s32[8,1], index: 0, kind: input, shape index: {}]
  %s1 = inlined_call_operand.vmem [shape: f32[8,128], index: 1, kind: input, shape index: {}]
  %s2 = inlined_call_operand.vmem [shape: bf16[128,32], index: 2, kind: input, shape index: {}]
  %s3 = inlined_call_operand.vmem [shape: bf16[32,384], index: 3, kind: input, shape index: {}]
  %s4 = inlined_call_operand.hbm [shape: bf16[128,384], index: 4, kind: input, shape index: {}]
  %s5 = inlined_call_operand.vmem [shape: f32[1,384], index: 5, kind: input, shape index: {}]
  %s6 = inlined_call_operand.vmem [shape: f32[1,128], index: 6, kind: input, shape index: {}]
  %s7 = inlined_call_operand.hbm [shape: bf16[128,128], index: 7, kind: output, shape index: {0}]
  %s8 = inlined_call_operand.hbm [shape: f32[8,128], index: 8, kind: output, shape index: {1}]
  %9 = xla_tuple %s7, %s8
  %s10 = sld [smem:[#allocation0]]
  $region81: #{tpu_custom_call.1} parent=0
    _
  %s12 = ssub.s32 1, %s10
  %s13 = scalar_select 0, %s12, %s10
  $region1: #{tpu_custom_call.1} parent=0
    #allocation3 [shape = 'u8[98304]{0}', space=vmem, size = 0x18000, scoped, tag = 'input window, operand 4, single buffered']
    #allocation4 [shape = 's32[2]{0}', space=sflag, size = 0x8, scoped, tag = 'scoped memory for tpu_custom_call.1']
    #allocation5 [shape = 's32[2]{0}', space=sflag, size = 0x8, scoped, tag = 'scoped memory for tpu_custom_call.1']
    #allocation6 [shape = 'u8[32768]{0}', space=vmem, size = 0x8000, scoped, tag = 'output window, operand 0']
    #allocation7 [shape = 'u8[4096]{0}', space=vmem, size = 0x1000, scoped, tag = 'output window, operand 1, single buffered']
    #allocation8 [shape = 's32[1]{0}', space=sflag, size = 0x4, scoped, tag = 'scoped memory for tpu_custom_call.1']
    %14 = vsyncpa [#allocation4], 0
    %15 = vsyncpa [#allocation5], 0
    %s16 = scalar_lea.sflag [#allocation5], 1
    %17 = vsyncpa %s16, 0
    %18 = vsyncpa [#allocation8], 0
    loop: start=0, step=1, limit=4
    $region2: #{tpu_custom_call.1} parent=1 // loop_pre_header
      _
    $region3: #{tpu_custom_call.1} parent=1 // loop_header
      %s20 = sphi 0, %s24
      %p21 = scmp.ge.s32.totalorder %s20, 4
      %s28 = sphi 0, %s28
      %s30 = sphi 0, %s28
      %s31 = sphi 0, %s30
      %s45 = sphi 0, %s31
      %s49 = sphi 0, %s49
      %s51 = sphi 0, %s49
      %s52 = sphi 0, %s51
      %s66 = sphi 0, %s52
      %s72 = sphi 0, %s74
      %s75 = sphi 0, %s72
      %s76 = sphi 0, %s75
      %s92 = sphi 0, %s76
      %s96 = sphi 0, %s96
      %s98 = sphi 0, %s96
      %s99 = sphi 0, %s98
      %s113 = sphi 0, %s99
      %s117 = sphi 0, %s117
      %s119 = sphi 0, %s117
      %s120 = sphi 0, %s119
      %s134 = sphi 0, %s120
      %s138 = sphi 0, %s138
      %s140 = sphi 0, %s138
      %s141 = sphi 0, %s140
      %s155 = sphi 0, %s141
      %s159 = sphi 0, %s159
      %s161 = sphi 0, %s159
      %s162 = sphi 0, %s161
      %s176 = sphi 0, %s162
      %s182 = sphi 0, %s184
      %s185 = sphi 0, %s182
      %s186 = sphi 0, %s185
      %s202 = sphi 0, %s186
      %s206 = sphi 0, %s206
      %s208 = sphi 0, %s206
      %s209 = sphi 0, %s208
      %s223 = sphi 0, %s209
    $region4: #{tpu_custom_call.1} parent=1 // loop_header_branch
      %23 = sbr.rel (%p21) target = $region8
    $region5: #{tpu_custom_call.1} parent=1 // loop_body
      %s25 = ssub.s32 %s20, 1
      %s26 = ssub.s32 %s20, 2
      %s27 = sadd.s32 %s20, 1
      %s29 = sadd.s32 %s28, 1
      %p32 = scmp.eq.s32.totalorder %s20, 1
      %p33 = scmp.ne.s32.totalorder %s28, %s30
      %p34 = scmp.eq.s32.totalorder %s20, 0
      %p35 = por %p33, %p34
      %p36 = scmp.ne.s32.totalorder %s28, %s30
      %p37 = scmp.eq.s32.totalorder %s25, 1
      %p38 = por %p36, %p37
      %p39 = scmp.ne.s32.totalorder %s30, %s31
      %p40 = scmp.eq.s32.totalorder %s25, 0
      %p41 = por %p39, %p40
      %p42 = scmp.ne.s32.totalorder %s30, %s31
      %p43 = scmp.eq.s32.totalorder %s26, 1
      %p44 = por %p42, %p43
      %p46 = scmp.ne.s32.totalorder %s31, %s45
      %p47 = scmp.eq.s32.totalorder %s26, 0
      %p48 = por %p46, %p47
      %s50 = sadd.s32 %s49, 1
      %p53 = scmp.eq.s32.totalorder %s20, 1
      %p54 = scmp.ne.s32.totalorder %s49, %s51
      %p55 = scmp.eq.s32.totalorder %s20, 0
      %p56 = por %p54, %p55
      %p57 = scmp.ne.s32.totalorder %s49, %s51
      %p58 = scmp.eq.s32.totalorder %s25, 1
      %p59 = por %p57, %p58
      %p60 = scmp.ne.s32.totalorder %s51, %s52
      %p61 = scmp.eq.s32.totalorder %s25, 0
      %p62 = por %p60, %p61
      %p63 = scmp.ne.s32.totalorder %s51, %s52
      %p64 = scmp.eq.s32.totalorder %s26, 1
      %p65 = por %p63, %p64
      %p67 = scmp.ne.s32.totalorder %s52, %s66
      %p68 = scmp.eq.s32.totalorder %s26, 0
      %p69 = por %p67, %p68
      %s70 = ssub.s32 %s20, %s27
      %p71 = scmp.eq.s32.totalorder %s70, 0
      %s73 = sadd.s32 %s72, 1
      %s74 = scalar_select %p71, %s72, %s73
      %p77 = pneg %p71
      %p78 = scmp.eq.s32.totalorder %s20, 1
      %p79 = por %p77, %p78
      %p80 = scmp.ne.s32.totalorder %s72, %s75
      %p81 = scmp.eq.s32.totalorder %s20, 0
      %p82 = por %p80, %p81
      %p83 = scmp.ne.s32.totalorder %s72, %s75
      %p84 = scmp.eq.s32.totalorder %s25, 1
      %p85 = por %p83, %p84
      %p86 = scmp.ne.s32.totalorder %s75, %s76
      %p87 = scmp.eq.s32.totalorder %s25, 0
      %p88 = por %p86, %p87
      %p89 = scmp.ne.s32.totalorder %s75, %s76
      %p90 = scmp.eq.s32.totalorder %s26, 1
      %p91 = por %p89, %p90
      %p93 = scmp.ne.s32.totalorder %s76, %s92
      %p94 = scmp.eq.s32.totalorder %s26, 0
      %p95 = por %p93, %p94
      %s97 = sadd.s32 %s96, 1
      %p100 = scmp.eq.s32.totalorder %s20, 1
      %p101 = scmp.ne.s32.totalorder %s96, %s98
      %p102 = scmp.eq.s32.totalorder %s20, 0
      %p103 = por %p101, %p102
      %p104 = scmp.ne.s32.totalorder %s96, %s98
      %p105 = scmp.eq.s32.totalorder %s25, 1
      %p106 = por %p104, %p105
      %p107 = scmp.ne.s32.totalorder %s98, %s99
      %p108 = scmp.eq.s32.totalorder %s25, 0
      %p109 = por %p107, %p108
      %p110 = scmp.ne.s32.totalorder %s98, %s99
      %p111 = scmp.eq.s32.totalorder %s26, 1
      %p112 = por %p110, %p111
      %p114 = scmp.ne.s32.totalorder %s99, %s113
      %p115 = scmp.eq.s32.totalorder %s26, 0
      %p116 = por %p114, %p115
      %s118 = sadd.s32 %s117, 1
      %p121 = scmp.eq.s32.totalorder %s20, 1
      %p122 = scmp.ne.s32.totalorder %s117, %s119
      %p123 = scmp.eq.s32.totalorder %s20, 0
      %p124 = por %p122, %p123
      %p125 = scmp.ne.s32.totalorder %s117, %s119
      %p126 = scmp.eq.s32.totalorder %s25, 1
      %p127 = por %p125, %p126
      %p128 = scmp.ne.s32.totalorder %s119, %s120
      %p129 = scmp.eq.s32.totalorder %s25, 0
      %p130 = por %p128, %p129
      %p131 = scmp.ne.s32.totalorder %s119, %s120
      %p132 = scmp.eq.s32.totalorder %s26, 1
      %p133 = por %p131, %p132
      %p135 = scmp.ne.s32.totalorder %s120, %s134
      %p136 = scmp.eq.s32.totalorder %s26, 0
      %p137 = por %p135, %p136
      %s139 = sadd.s32 %s138, 1
      %p142 = scmp.eq.s32.totalorder %s20, 1
      %p143 = scmp.ne.s32.totalorder %s138, %s140
      %p144 = scmp.eq.s32.totalorder %s20, 0
      %p145 = por %p143, %p144
      %p146 = scmp.ne.s32.totalorder %s138, %s140
      %p147 = scmp.eq.s32.totalorder %s25, 1
      %p148 = por %p146, %p147
      %p149 = scmp.ne.s32.totalorder %s140, %s141
      %p150 = scmp.eq.s32.totalorder %s25, 0
      %p151 = por %p149, %p150
      %p152 = scmp.ne.s32.totalorder %s140, %s141
      %p153 = scmp.eq.s32.totalorder %s26, 1
      %p154 = por %p152, %p153
      %p156 = scmp.ne.s32.totalorder %s141, %s155
      %p157 = scmp.eq.s32.totalorder %s26, 0
      %p158 = por %p156, %p157
      %s160 = sadd.s32 %s159, 1
      %p163 = scmp.eq.s32.totalorder %s20, 1
      %p164 = scmp.ne.s32.totalorder %s159, %s161
      %p165 = scmp.eq.s32.totalorder %s20, 0
      %p166 = por %p164, %p165
      %p167 = scmp.ne.s32.totalorder %s159, %s161
      %p168 = scmp.eq.s32.totalorder %s25, 1
      %p169 = por %p167, %p168
      %p170 = scmp.ne.s32.totalorder %s161, %s162
      %p171 = scmp.eq.s32.totalorder %s25, 0
      %p172 = por %p170, %p171
      %p173 = scmp.ne.s32.totalorder %s161, %s162
      %p174 = scmp.eq.s32.totalorder %s26, 1
      %p175 = por %p173, %p174
      %p177 = scmp.ne.s32.totalorder %s162, %s176
      %p178 = scmp.eq.s32.totalorder %s26, 0
      %p179 = por %p177, %p178
      %s180 = ssub.s32 %s20, %s27
      %p181 = scmp.eq.s32.totalorder %s180, 0
      %s183 = sadd.s32 %s182, 1
      %s184 = scalar_select %p181, %s182, %s183
      %p187 = pneg %p181
      %p188 = scmp.eq.s32.totalorder %s20, 1
      %p189 = por %p187, %p188
      %p190 = scmp.ne.s32.totalorder %s182, %s185
      %p191 = scmp.eq.s32.totalorder %s20, 0
      %p192 = por %p190, %p191
      %p193 = scmp.ne.s32.totalorder %s182, %s185
      %p194 = scmp.eq.s32.totalorder %s25, 1
      %p195 = por %p193, %p194
      %p196 = scmp.ne.s32.totalorder %s185, %s186
      %p197 = scmp.eq.s32.totalorder %s25, 0
      %p198 = por %p196, %p197
      %p199 = scmp.ne.s32.totalorder %s185, %s186
      %p200 = scmp.eq.s32.totalorder %s26, 1
      %p201 = por %p199, %p200
      %p203 = scmp.ne.s32.totalorder %s186, %s202
      %p204 = scmp.eq.s32.totalorder %s26, 0
      %p205 = por %p203, %p204
      %s207 = sadd.s32 %s206, 1
      %p210 = scmp.eq.s32.totalorder %s20, 1
      %p211 = scmp.ne.s32.totalorder %s206, %s208
      %p212 = scmp.eq.s32.totalorder %s20, 0
      %p213 = por %p211, %p212
      %p214 = scmp.ne.s32.totalorder %s206, %s208
      %p215 = scmp.eq.s32.totalorder %s25, 1
      %p216 = por %p214, %p215
      %p217 = scmp.ne.s32.totalorder %s208, %s209
      %p218 = scmp.eq.s32.totalorder %s25, 0
      %p219 = por %p217, %p218
      %p220 = scmp.ne.s32.totalorder %s208, %s209
      %p221 = scmp.eq.s32.totalorder %s26, 1
      %p222 = por %p220, %p221
      %p224 = scmp.ne.s32.totalorder %s209, %s223
      %p225 = scmp.eq.s32.totalorder %s26, 0
      %p226 = por %p224, %p225
      %p227 = scmp.le.s32.totalorder 1, %s20
      %p228 = scmp.lt.s32.totalorder %s20, 3
      %p229 = pnand %p227, %p228
      %p230 = pneg %p229
      // Predicated region
      $region9: #{tpu_custom_call.1} parent=5 // pred_check
        _
      $region10: #{tpu_custom_call.1} parent=5 // pred_check_branch
        %232 = sbr.rel (%p229) target = $region12
      $region11: #{tpu_custom_call.1} parent=5 // pred_region
        %s233 = ssub.s32 %s20, 1
        // Predicated region
        $region13: #{tpu_custom_call.1} parent=11 // pred_check
          %p234 = pneg %p41
        $region14: #{tpu_custom_call.1} parent=11 // pred_check_branch
          %236 = sbr.rel (%p234) target = $region16
        $region15: #{tpu_custom_call.1} parent=11 // pred_region
          _
        $region16: #{tpu_custom_call.1} parent=11 // pred_fallthru
          _
        // Predicated region
        $region17: #{tpu_custom_call.1} parent=11 // pred_check
          %p237 = pneg %p62
        $region18: #{tpu_custom_call.1} parent=11 // pred_check_branch
          %239 = sbr.rel (%p237) target = $region20
        $region19: #{tpu_custom_call.1} parent=11 // pred_region
          _
        $region20: #{tpu_custom_call.1} parent=11 // pred_fallthru
          _
        // Predicated region
        $region21: #{tpu_custom_call.1} parent=11 // pred_check
          %p240 = pneg %p109
        $region22: #{tpu_custom_call.1} parent=11 // pred_check_branch
          %242 = sbr.rel (%p240) target = $region24
        $region23: #{tpu_custom_call.1} parent=11 // pred_region
          _
        $region24: #{tpu_custom_call.1} parent=11 // pred_fallthru
          _
        // Predicated region
        $region25: #{tpu_custom_call.1} parent=11 // pred_check
          %p243 = pneg %p130
        $region26: #{tpu_custom_call.1} parent=11 // pred_check_branch
          %245 = sbr.rel (%p243) target = $region28
        $region27: #{tpu_custom_call.1} parent=11 // pred_region
          %s247 = ssub.s32 3072, 3072
          %248 = vsyncadd [#allocation4], %s247
          %s249 = sshll.u32 [#allocation3], 4
          %s250 = int_to_ptr.vmem [resolvable:$true] %s249
          %255 = dma.hbm_to_vmem [thread:$0]  %s4, 3072, %s250, [#allocation4], 192, 192, 12
        $region28: #{tpu_custom_call.1} parent=11 // pred_fallthru
          _
        // Predicated region
        $region29: #{tpu_custom_call.1} parent=11 // pred_check
          %p256 = pneg %p151
        $region30: #{tpu_custom_call.1} parent=11 // pred_check_branch
          %258 = sbr.rel (%p256) target = $region32
        $region31: #{tpu_custom_call.1} parent=11 // pred_region
          _
        $region32: #{tpu_custom_call.1} parent=11 // pred_fallthru
          _
        // Predicated region
        $region33: #{tpu_custom_call.1} parent=11 // pred_check
          %p259 = pneg %p172
        $region34: #{tpu_custom_call.1} parent=11 // pred_check_branch
          %261 = sbr.rel (%p259) target = $region36
        $region35: #{tpu_custom_call.1} parent=11 // pred_region
          _
        $region36: #{tpu_custom_call.1} parent=11 // pred_fallthru
          _
      $region12: #{tpu_custom_call.1} parent=5 // pred_fallthru
        _
      %p262 = scmp.lt.s32.totalorder %s20, 2
      // Predicated region
      $region37: #{tpu_custom_call.1} parent=5 // pred_check
        %p263 = pneg %p262
      $region38: #{tpu_custom_call.1} parent=5 // pred_check_branch
        %265 = sbr.rel (%p263) target = $region40
      $region39: #{tpu_custom_call.1} parent=5 // pred_region
        // Predicated region
        $region41: #{tpu_custom_call.1} parent=39 // pred_check
          %p266 = pneg %p82
        $region42: #{tpu_custom_call.1} parent=39 // pred_check_branch
          %268 = sbr.rel (%p266) target = $region44
        $region43: #{tpu_custom_call.1} parent=39 // pred_region
          %s269 = smul.u32 8, %s20
          %p270 = scmp.lt.s32.totalorder %s269, 15
          %s271 = scalar_select %p270, %s269, 15
          %s272 = smul.addr %s271, 4
          %s273 = scalar_lea.vmem %s2, %s272
          %s274 = smul.u32 8, %s20
        $region44: #{tpu_custom_call.1} parent=39 // pred_fallthru
          _
      $region40: #{tpu_custom_call.1} parent=5 // pred_fallthru
        _
      %p275 = scmp.le.s32.totalorder 1, %s20
      %p276 = scmp.lt.s32.totalorder %s20, 3
      %p277 = pnand %p275, %p276
      %p278 = pneg %p277
      // Predicated region
      $region45: #{tpu_custom_call.1} parent=5 // pred_check
        _
      $region46: #{tpu_custom_call.1} parent=5 // pred_check_branch
        %280 = sbr.rel (%p277) target = $region48
      $region47: #{tpu_custom_call.1} parent=5 // pred_region
        %s281 = ssub.s32 %s20, 1
        // Predicated region
        $region49: #{tpu_custom_call.1} parent=47 // pred_check
          %p282 = pneg %p130
        $region50: #{tpu_custom_call.1} parent=47 // pred_check_branch
          %284 = sbr.rel (%p282) target = $region52
        $region51: #{tpu_custom_call.1} parent=47 // pred_region
          %285 = dma.done [#allocation4], 3072
        $region52: #{tpu_custom_call.1} parent=47 // pred_fallthru
          _
        %p286 = pneg %p41
        %p287 = pneg %p38
        %p288 = pneg %p62
        %p289 = pneg %p59
        %s290 = smul.u32 8, %s25
        %p291 = scmp.lt.s32.totalorder %s290, 15
        %s292 = scalar_select %p291, %s290, 15
        %s293 = smul.addr %s292, 4
        %s294 = scalar_lea.vmem %s2, %s293
        %p295 = pneg %p88
        %p296 = pneg %p85
        %p297 = pneg %p109
        %p298 = pneg %p106
        %p299 = pneg %p130
        %p300 = pneg %p127
        %p301 = pneg %p151
        %p302 = pneg %p148
        %p303 = pneg %p172
        %p304 = pneg %p169
        %p305 = pneg %p198
        %p306 = pneg %p195
        %s307 = sand.u32 %s185, 1
        %s308 = scalar_lea.sflag [#allocation5], %s307
        %s309 = sand.u32 %s185, 1
        %s310 = smul.addr %s309, 32
        %s311 = scalar_lea.vmem [#allocation6], %s310
        %p312 = pneg %p219
        %p313 = pneg %p216
        %s314 = smul.u32 8, %s25
        %p315 = scmp.lt.s32.totalorder %s314, 15
        %s316 = scalar_select %p315, %s314, 15
        %s317 = smul.addr %s316, 4
        %s318 = scalar_lea.vmem %s2, %s317
        %s319 = smul.u32 8, %s25
        %s320 = smul.u32 8, %s25
        %p322 = scmp.eq.s32.totalorder %s25, 0
        // Predicated region
        $region53: #{tpu_custom_call.1} parent=47 // pred_check
          %p323 = pneg %p322
        $region54: #{tpu_custom_call.1} parent=47 // pred_check_branch
          %325 = sbr.rel (%p323) target = $region56
        $region55: #{tpu_custom_call.1} parent=47 // pred_region
          %v326 = vld [vmem:[%s1] sm:$0xff]
          %327 = vst [vmem:[#allocation2] sm:$0xff] %v326
        $region56: #{tpu_custom_call.1} parent=47 // pred_fallthru
          _
        %v328 = vld [vmem:[%s3] sm:$0xff]
        %v329 = vld [vmem:[%s3 + $0x8] sm:$0xf]
        %v330 = vld [vmem:[%s3 + $0xc] sm:$0xff]
        %v331 = vld [vmem:[%s3 + $0x14] sm:$0xf]
        %v332 = vld [vmem:[%s3 + $0x18] sm:$0xff]
        %v333 = vld [vmem:[%s3 + $0x20] sm:$0xf]
        %v334 = vld [vmem:[%s3 + $0x24] sm:$0xff]
        %v335 = vld [vmem:[%s3 + $0x2c] sm:$0xf]
        %v336 = vld [vmem:[#allocation3] sm:$0xff]
        %v337 = vld [vmem:[#allocation3 + $0x8] sm:$0xf]
        %v338 = vld [vmem:[#allocation3 + $0xc] sm:$0xff]
        %v339 = vld [vmem:[#allocation3 + $0x14] sm:$0xf]
        %v340 = vld [vmem:[#allocation3 + $0x18] sm:$0xff]
        %v341 = vld [vmem:[#allocation3 + $0x20] sm:$0xf]
        %v342 = vld [vmem:[#allocation3 + $0x24] sm:$0xff]
        %v343 = vld [vmem:[#allocation3 + $0x2c] sm:$0xf]
        %v344 = vld [vmem:[#allocation3 + $0x30] sm:$0xff]
        %v345 = vld [vmem:[#allocation3 + $0x38] sm:$0xf]
        %v346 = vld [vmem:[#allocation3 + $0x3c] sm:$0xff]
        %v347 = vld [vmem:[#allocation3 + $0x44] sm:$0xf]
        %v348 = vld [vmem:[#allocation3 + $0x48] sm:$0xff]
        %v349 = vld [vmem:[#allocation3 + $0x50] sm:$0xf]
        %v350 = vld [vmem:[#allocation3 + $0x54] sm:$0xff]
        %v351 = vld [vmem:[#allocation3 + $0x5c] sm:$0xf]
        %v352 = vld [vmem:[#allocation3 + $0x60] sm:$0xff]
        %v353 = vld [vmem:[#allocation3 + $0x68] sm:$0xf]
        %v354 = vld [vmem:[#allocation3 + $0x6c] sm:$0xff]
        %v355 = vld [vmem:[#allocation3 + $0x74] sm:$0xf]
        %v356 = vld [vmem:[#allocation3 + $0x78] sm:$0xff]
        %v357 = vld [vmem:[#allocation3 + $0x80] sm:$0xf]
        %v358 = vld [vmem:[#allocation3 + $0x84] sm:$0xff]
        %v359 = vld [vmem:[#allocation3 + $0x8c] sm:$0xf]
        %v360 = vld [vmem:[#allocation3 + $0x90] sm:$0xff]
        %v361 = vld [vmem:[#allocation3 + $0x98] sm:$0xf]
        %v362 = vld [vmem:[#allocation3 + $0x9c] sm:$0xff]
        %v363 = vld [vmem:[#allocation3 + $0xa4] sm:$0xf]
        %v364 = vld [vmem:[#allocation3 + $0xa8] sm:$0xff]
        %v365 = vld [vmem:[#allocation3 + $0xb0] sm:$0xf]
        %v366 = vld [vmem:[#allocation3 + $0xb4] sm:$0xff]
        %v367 = vld [vmem:[#allocation3 + $0xbc] sm:$0xf]
        %v368 = vld [vmem:[%s5] sm:$0x7]
        %v369 = vld [vmem:[%s6] sm:$0x1]
        %v370 = vld [vmem:[%s318] sm:$0xf]
        %v371 = vld [vmem:[%s318 + $0x4] sm:$0xf]
        %v372 = vld [vmem:[%s318 + $0x8] sm:$0xf]
        %v373 = vld [vmem:[%s318 + $0xc] sm:$0xf]
        %v374 = vld [vmem:[%s318 + $0x10] sm:$0xf]
        %v375 = vld [vmem:[%s318 + $0x14] sm:$0xf]
        %v376 = vld [vmem:[%s318 + $0x18] sm:$0xf]
        %v377 = vld [vmem:[%s318 + $0x1c] sm:$0xf]
        %v379 = vlaneseq
        %v380 = vshrl.u32 %v379, 7
        %v381 = vsub.s32 0, %v380
        %v382 = vrot.slane %v368, %v381
        %v383 = vlaneseq
        %v384 = vshrl.u32 %v383, 7
        %v385 = vsub.s32 1, %v384
        %v386 = vrot.slane %v368, %v385
        %v387 = vlaneseq
        %v388 = vshrl.u32 %v387, 7
        %v389 = vsub.s32 2, %v388
        %v390 = vrot.slane %v368, %v389
        %v402 = vunpack.c.l.b16 %v370
        %v403 = vunpack.c.l.b16 %v371
        %v404 = vunpack.c.l.b16 %v372
        %v405 = vunpack.c.l.b16 %v373
        %v406 = vunpack.c.l.b16 %v374
        %v407 = vunpack.c.l.b16 %v375
        %v408 = vunpack.c.l.b16 %v376
        %v409 = vunpack.c.l.b16 %v377
        %v410 = vpack.c.b16 %v403, %v402
        %v411 = vpack.c.b16 %v405, %v404
        %v412 = vpack.c.b16 %v407, %v406
        %v413 = vpack.c.b16 %v409, %v408
        %v422 = vunpack.c.l.b16 %v328
        %v423 = vunpack.c.h.b16 %v328
        %v424 = vunpack.c.l.b16 %v329
        %v425 = vunpack.c.l.b16 %v330
        %v426 = vunpack.c.h.b16 %v330
        %v427 = vunpack.c.l.b16 %v331
        %v428 = vunpack.c.l.b16 %v332
        %v429 = vunpack.c.h.b16 %v332
        %v430 = vunpack.c.l.b16 %v333
        %v431 = vunpack.c.l.b16 %v334
        %v432 = vunpack.c.h.b16 %v334
        %v433 = vunpack.c.l.b16 %v335
        %v434 = vpack.c.b16 %v425, %v422
        %v435 = vpack.c.b16 %v426, %v423
        %v436 = vpack.c.b16 %v427, %v424
        %v437 = vpack.c.b16 %v431, %v428
        %v438 = vpack.c.b16 %v432, %v429
        %v439 = vpack.c.b16 %v433, %v430
        %vm446 = vcmask 261120
        %v448 = vsel %vm446, %v410, 0
        %v451 = vsel %vm446, %v411, 0
        %v454 = vsel %vm446, %v412, 0
        %v457 = vsel %vm446, %v413, 0
        %459 = vmatprep.subr.bf16.mxu0 %v435
        %460 = vmatpush1.bf16.msra.mxu0 %v434
        %461 = vmatprep.subr.bf16.mxu0 %v438
        %462 = vmatpush1.bf16.msra.mxu0 %v437
        %463 = vmatprep.subr.bf16.mxu0 0
        %464 = vmatpush1.bf16.msra.mxu0 0
        %465 = vmatprep.subr.bf16.mxu0 0
        %466 = vmatpush1.bf16.msra.mxu0 0
        %467 = vmatprep.subr.bf16.mxu0 0
        %468 = vmatpush1.bf16.msra.mxu0 0
        %469 = vmatprep.subr.bf16.mxu0 0
        %470 = vmatpush1.bf16.msra.mxu0 0
        %471 = vmatprep.subr.bf16.mxu0 0
        %472 = vmatpush1.bf16.msra.mxu0 0
        %473 = vmatprep.subr.bf16.mxu0 0
        %474 = vmatpush1.bf16.msra.mxu0 0
        %475 = vmatprep.subr.bf16.mxu0 0
        %476 = vmatpush1.bf16.msra.mxu0 0
        %477 = vmatprep.subr.bf16.mxu0 0
        %478 = vmatpush1.bf16.msra.mxu0 0
        %479 = vmatprep.subr.bf16.mxu0 0
        %480 = vmatpush1.bf16.msra.mxu0 0
        %481 = vmatprep.subr.bf16.mxu0 0
        %482 = vmatpush1.bf16.msra.mxu0 0
        %483 = vmatprep.subr.bf16.mxu0 0
        %484 = vmatpush1.bf16.msra.mxu0 0
        %485 = vmatprep.subr.bf16.mxu0 0
        %486 = vmatpush1.bf16.msra.mxu0 0
        %487 = vmatprep.subr.bf16.mxu0 0
        %488 = vmatpush1.bf16.msra.mxu0 0
        %489 = vmatprep.subr.bf16.mxu0 0
        %490 = vmatpush1.bf16.msra.mxu0 0
        %491 = vmatprep.mubr.bf16.mxu0 0
        %492 = vmatmul.mubr.bf16.gmra.mrb[0].mxu0 %v448
        %v493 = vpop.f32.mrb[0].mxu0
        %v494 = vadd.f32 %v382, %v493
        %v495 = vpop.f32.mrb[0].mxu0
        %v496 = vadd.f32 %v386, %v495
        %v497 = vpop.f32.mrb[0].mxu0
        %v498 = vadd.f32 %v382, %v497
        %v499 = vpop.f32.mrb[0].mxu0
        %v500 = vadd.f32 %v386, %v499
        %501 = vmatprep.mubr.bf16.mxu0 0
        %502 = vmatmul.mubr.bf16.gmra.mrb[0].mxu0 %v451
        %v503 = vpop.f32.mrb[0].mxu0
        %v504 = vadd.f32 %v382, %v503
        %v505 = vpop.f32.mrb[0].mxu0
        %v506 = vadd.f32 %v386, %v505
        %v507 = vpop.f32.mrb[0].mxu0
        %v508 = vadd.f32 %v382, %v507
        %v509 = vpop.f32.mrb[0].mxu0
        %v510 = vadd.f32 %v386, %v509
        %511 = vmatprep.mubr.bf16.mxu0 0
        %512 = vmatmul.mubr.bf16.gmra.mrb[0].mxu0 %v454
        %v513 = vpop.f32.mrb[0].mxu0
        %v514 = vadd.f32 %v382, %v513
        %v515 = vpop.f32.mrb[0].mxu0
        %v516 = vadd.f32 %v386, %v515
        %v517 = vpop.f32.mrb[0].mxu0
        %v518 = vadd.f32 %v382, %v517
        %v519 = vpop.f32.mrb[0].mxu0
        %v520 = vadd.f32 %v386, %v519
        %521 = vmatprep.mubr.bf16.mxu0 0
        %522 = vmatmul.mubr.bf16.gmra.mrb[0].mxu0 %v457
        %v523 = vpop.f32.mrb[0].mxu0
        %v524 = vadd.f32 %v382, %v523
        %v525 = vpop.f32.mrb[0].mxu0
        %v526 = vadd.f32 %v386, %v525
        %v527 = vpop.f32.mrb[0].mxu0
        %v528 = vadd.f32 %v382, %v527
        %v529 = vpop.f32.mrb[0].mxu0
        %v530 = vadd.f32 %v386, %v529
        %531 = vdwg.mxu0
        %532 = vmatprep.subr.bf16.mxu0 0
        %533 = vmatpush1.bf16.msra.mxu0 %v436
        %534 = vmatprep.subr.bf16.mxu0 0
        %535 = vmatpush1.bf16.msra.mxu0 %v439
        %536 = vmatprep.subr.bf16.mxu0 0
        %537 = vmatpush1.bf16.msra.mxu0 0
        %538 = vmatprep.subr.bf16.mxu0 0
        %539 = vmatpush1.bf16.msra.mxu0 0
        %540 = vmatprep.subr.bf16.mxu0 0
        %541 = vmatpush1.bf16.msra.mxu0 0
        %542 = vmatprep.subr.bf16.mxu0 0
        %543 = vmatpush1.bf16.msra.mxu0 0
        %544 = vmatprep.subr.bf16.mxu0 0
        %545 = vmatpush1.bf16.msra.mxu0 0
        %546 = vmatprep.subr.bf16.mxu0 0
        %547 = vmatpush1.bf16.msra.mxu0 0
        %548 = vmatprep.subr.bf16.mxu0 0
        %549 = vmatpush1.bf16.msra.mxu0 0
        %550 = vmatprep.subr.bf16.mxu0 0
        %551 = vmatpush1.bf16.msra.mxu0 0
        %552 = vmatprep.subr.bf16.mxu0 0
        %553 = vmatpush1.bf16.msra.mxu0 0
        %554 = vmatprep.subr.bf16.mxu0 0
        %555 = vmatpush1.bf16.msra.mxu0 0
        %556 = vmatprep.subr.bf16.mxu0 0
        %557 = vmatpush1.bf16.msra.mxu0 0
        %558 = vmatprep.subr.bf16.mxu0 0
        %559 = vmatpush1.bf16.msra.mxu0 0
        %560 = vmatprep.subr.bf16.mxu0 0
        %561 = vmatpush1.bf16.msra.mxu0 0
        %562 = vmatprep.subr.bf16.mxu0 0
        %563 = vmatpush1.bf16.msra.mxu0 0
        %564 = vmatprep.mubr.bf16.mxu0 0
        %565 = vmatmul.mubr.bf16.gmra.mrb[0].mxu0 %v448
        %v566 = vpop.f32.mrb[0].mxu0
        %v567 = vadd.f32 %v390, %v566
        %v568 = vpop.f32.mrb[0].mxu0
        %v569 = vpop.f32.mrb[0].mxu0
        %v570 = vadd.f32 %v390, %v569
        %v571 = vpop.f32.mrb[0].mxu0
        %572 = vmatprep.mubr.bf16.mxu0 0
        %573 = vmatmul.mubr.bf16.gmra.mrb[0].mxu0 %v451
        %v574 = vpop.f32.mrb[0].mxu0
        %v575 = vadd.f32 %v390, %v574
        %v576 = vpop.f32.mrb[0].mxu0
        %v577 = vpop.f32.mrb[0].mxu0
        %v578 = vadd.f32 %v390, %v577
        %v579 = vpop.f32.mrb[0].mxu0
        %580 = vmatprep.mubr.bf16.mxu0 0
        %581 = vmatmul.mubr.bf16.gmra.mrb[0].mxu0 %v454
        %v582 = vpop.f32.mrb[0].mxu0
        %v583 = vadd.f32 %v390, %v582
        %v584 = vpop.f32.mrb[0].mxu0
        %v585 = vpop.f32.mrb[0].mxu0
        %v586 = vadd.f32 %v390, %v585
        %v587 = vpop.f32.mrb[0].mxu0
        %588 = vmatprep.mubr.bf16.mxu0 0
        %589 = vmatmul.mubr.bf16.gmra.mrb[0].mxu0 %v457
        %v590 = vpop.f32.mrb[0].mxu0
        %v591 = vadd.f32 %v390, %v590
        %v592 = vpop.f32.mrb[0].mxu0
        %v593 = vpop.f32.mrb[0].mxu0
        %v594 = vadd.f32 %v390, %v593
        %v595 = vpop.f32.mrb[0].mxu0
        %596 = vdwg.mxu0
        %v597 = vld [vmem:[%s0] sm:$0xff]
        %s598 = smul.u32 %s25, 8
        %v599 = vld [vmem:[#allocation2] sm:$0xff]
        %v600 = vpack.c.bf16 %v599, %v599
        %v633 = vunpack.c.l.b16 %v336
        %v634 = vunpack.c.h.b16 %v336
        %v635 = vunpack.c.l.b16 %v337
        %v636 = vunpack.c.l.b16 %v338
        %v637 = vunpack.c.h.b16 %v338
        %v638 = vunpack.c.l.b16 %v339
        %v639 = vunpack.c.l.b16 %v340
        %v640 = vunpack.c.h.b16 %v340
        %v641 = vunpack.c.l.b16 %v341
        %v642 = vunpack.c.l.b16 %v342
        %v643 = vunpack.c.h.b16 %v342
        %v644 = vunpack.c.l.b16 %v343
        %v645 = vunpack.c.l.b16 %v344
        %v646 = vunpack.c.h.b16 %v344
        %v647 = vunpack.c.l.b16 %v345
        %v648 = vunpack.c.l.b16 %v346
        %v649 = vunpack.c.h.b16 %v346
        %v650 = vunpack.c.l.b16 %v347
        %v651 = vunpack.c.l.b16 %v348
        %v652 = vunpack.c.h.b16 %v348
        %v653 = vunpack.c.l.b16 %v349
        %v654 = vunpack.c.l.b16 %v350
        %v655 = vunpack.c.h.b16 %v350
        %v656 = vunpack.c.l.b16 %v351
        %v657 = vunpack.c.l.b16 %v352
        %v658 = vunpack.c.h.b16 %v352
        %v659 = vunpack.c.l.b16 %v353
        %v660 = vunpack.c.l.b16 %v354
        %v661 = vunpack.c.h.b16 %v354
        %v662 = vunpack.c.l.b16 %v355
        %v663 = vunpack.c.l.b16 %v356
        %v664 = vunpack.c.h.b16 %v356
        %v665 = vunpack.c.l.b16 %v357
        %v666 = vunpack.c.l.b16 %v358
        %v667 = vunpack.c.h.b16 %v358
        %v668 = vunpack.c.l.b16 %v359
        %v669 = vunpack.c.l.b16 %v360
        %v670 = vunpack.c.h.b16 %v360
        %v671 = vunpack.c.l.b16 %v361
        %v672 = vunpack.c.l.b16 %v362
        %v673 = vunpack.c.h.b16 %v362
        %v674 = vunpack.c.l.b16 %v363
        %v675 = vunpack.c.l.b16 %v364
        %v676 = vunpack.c.h.b16 %v364
        %v677 = vunpack.c.l.b16 %v365
        %v678 = vunpack.c.l.b16 %v366
        %v679 = vunpack.c.h.b16 %v366
        %v680 = vunpack.c.l.b16 %v367
        %v681 = vpack.c.b16 %v636, %v633
        %v682 = vpack.c.b16 %v637, %v634
        %v683 = vpack.c.b16 %v638, %v635
        %v684 = vpack.c.b16 %v642, %v639
        %v685 = vpack.c.b16 %v643, %v640
        %v686 = vpack.c.b16 %v644, %v641
        %v687 = vpack.c.b16 %v648, %v645
        %v688 = vpack.c.b16 %v649, %v646
        %v689 = vpack.c.b16 %v650, %v647
        %v690 = vpack.c.b16 %v654, %v651
        %v691 = vpack.c.b16 %v655, %v652
        %v692 = vpack.c.b16 %v656, %v653
        %v693 = vpack.c.b16 %v660, %v657
        %v694 = vpack.c.b16 %v661, %v658
        %v695 = vpack.c.b16 %v662, %v659
        %v696 = vpack.c.b16 %v666, %v663
        %v697 = vpack.c.b16 %v667, %v664
        %v698 = vpack.c.b16 %v668, %v665
        %v699 = vpack.c.b16 %v672, %v669
        %v700 = vpack.c.b16 %v673, %v670
        %v701 = vpack.c.b16 %v674, %v671
        %v702 = vpack.c.b16 %v678, %v675
        %v703 = vpack.c.b16 %v679, %v676
        %v704 = vpack.c.b16 %v680, %v677
        %729 = vmatprep.subr.bf16.mxu0 %v682
        %730 = vmatpush1.bf16.msra.mxu0 %v681
        %731 = vmatprep.subr.bf16.mxu0 %v685
        %732 = vmatpush1.bf16.msra.mxu0 %v684
        %733 = vmatprep.subr.bf16.mxu0 %v688
        %734 = vmatpush1.bf16.msra.mxu0 %v687
        %735 = vmatprep.subr.bf16.mxu0 %v691
        %736 = vmatpush1.bf16.msra.mxu0 %v690
        %737 = vmatprep.subr.bf16.mxu0 %v694
        %738 = vmatpush1.bf16.msra.mxu0 %v693
        %739 = vmatprep.subr.bf16.mxu0 %v697
        %740 = vmatpush1.bf16.msra.mxu0 %v696
        %741 = vmatprep.subr.bf16.mxu0 %v700
        %742 = vmatpush1.bf16.msra.mxu0 %v699
        %743 = vmatprep.subr.bf16.mxu0 %v703
        %744 = vmatpush1.bf16.msra.mxu0 %v702
        %745 = vmatprep.subr.bf16.mxu0 0
        %746 = vmatpush1.bf16.msra.mxu0 0
        %747 = vmatprep.subr.bf16.mxu0 0
        %748 = vmatpush1.bf16.msra.mxu0 0
        %749 = vmatprep.subr.bf16.mxu0 0
        %750 = vmatpush1.bf16.msra.mxu0 0
        %751 = vmatprep.subr.bf16.mxu0 0
        %752 = vmatpush1.bf16.msra.mxu0 0
        %753 = vmatprep.subr.bf16.mxu0 0
        %754 = vmatpush1.bf16.msra.mxu0 0
        %755 = vmatprep.subr.bf16.mxu0 0
        %756 = vmatpush1.bf16.msra.mxu0 0
        %757 = vmatprep.subr.bf16.mxu0 0
        %758 = vmatpush1.bf16.msra.mxu0 0
        %759 = vmatprep.subr.bf16.mxu0 0
        %760 = vmatpush1.bf16.msra.mxu0 0
        %761 = vmatprep.mubr.bf16.mxu0 0
        %762 = vmatmul.mubr.bf16.gmra.mrb[0].mxu0 %v600
        %v763 = vpop.f32.mrb[0].mxu0
        %v764 = vadd.f32 0.0, %v763
        %v765 = vpop.f32.mrb[0].mxu0
        %v766 = vadd.f32 0.0, %v765
        %v767 = vpop.f32.mrb[0].mxu0
        %v768 = vpop.f32.mrb[0].mxu0
        %769 = vdwg.mxu0
        %770 = vmatprep.subr.bf16.mxu0 0
        %771 = vmatpush1.bf16.msra.mxu0 %v683
        %772 = vmatprep.subr.bf16.mxu0 0
        %773 = vmatpush1.bf16.msra.mxu0 %v686
        %774 = vmatprep.subr.bf16.mxu0 0
        %775 = vmatpush1.bf16.msra.mxu0 %v689
        %776 = vmatprep.subr.bf16.mxu0 0
        %777 = vmatpush1.bf16.msra.mxu0 %v692
        %778 = vmatprep.subr.bf16.mxu0 0
        %779 = vmatpush1.bf16.msra.mxu0 %v695
        %780 = vmatprep.subr.bf16.mxu0 0
        %781 = vmatpush1.bf16.msra.mxu0 %v698
        %782 = vmatprep.subr.bf16.mxu0 0
        %783 = vmatpush1.bf16.msra.mxu0 %v701
        %784 = vmatprep.subr.bf16.mxu0 0
        %785 = vmatpush1.bf16.msra.mxu0 %v704
        %786 = vmatprep.subr.bf16.mxu0 0
        %787 = vmatpush1.bf16.msra.mxu0 0
        %788 = vmatprep.subr.bf16.mxu0 0
        %789 = vmatpush1.bf16.msra.mxu0 0
        %790 = vmatprep.subr.bf16.mxu0 0
        %791 = vmatpush1.bf16.msra.mxu0 0
        %792 = vmatprep.subr.bf16.mxu0 0
        %793 = vmatpush1.bf16.msra.mxu0 0
        %794 = vmatprep.subr.bf16.mxu0 0
        %795 = vmatpush1.bf16.msra.mxu0 0
        %796 = vmatprep.subr.bf16.mxu0 0
        %797 = vmatpush1.bf16.msra.mxu0 0
        %798 = vmatprep.subr.bf16.mxu0 0
        %799 = vmatpush1.bf16.msra.mxu0 0
        %800 = vmatprep.subr.bf16.mxu0 0
        %801 = vmatpush1.bf16.msra.mxu0 0
        %802 = vmatprep.mubr.bf16.mxu0 0
        %803 = vmatmul.mubr.bf16.gmra.mrb[0].mxu0 %v600
        %v804 = vpop.f32.mrb[0].mxu0
        %v805 = vadd.f32 0.0, %v804
        %v806 = vpop.f32.mrb[0].mxu0
        %v807 = vpop.f32.mrb[0].mxu0
        %v808 = vpop.f32.mrb[0].mxu0
        %809 = vdwg.mxu0
        %v810 = vadd.f32 %v494, %v764
        %v811 = vxor.u32 %v810, 2147483648
        %v812 = vmul.f32 %v811, 1.442695
        %v813 = vpow.pop %v812
        %v814 = vadd.f32 %v813, 1.0
        %v815 = vrcp.pop %v814
        %v816 = vmul.f32 1.0, %v815
        %v817 = vadd.f32 %v496, %v766
        %v818 = vxor.u32 %v817, 2147483648
        %v819 = vmul.f32 %v818, 1.442695
        %v820 = vpow.pop %v819
        %v821 = vadd.f32 %v820, 1.0
        %v822 = vrcp.pop %v821
        %v823 = vmul.f32 1.0, %v822
        %v825 = vlaneseq
        %v826 = vshrl.u32 %v825, 7
        %v827 = vsub.s32 0, %v826
        %v828 = vrot.slane %v369, %v827
        %v830 = vadd.f32 %v805, %v828
        %v831 = vmul.f32 %v816, %v830
        %v832 = vadd.f32 %v567, %v831
        %v833 = vtanh.pop %v832
        %v834 = vsub.f32 1.0, %v823
        %v835 = vmul.f32 %v834, %v833
        %v836 = vmul.f32 %v823, %v599
        %v837 = vadd.f32 %v835, %v836
        %v838 = vstv %s598
        %vm839 = vcmp.lt.s32.totalorder %v838, %v597
        %v840 = vsel %vm839, 1, 0
        %841 = vset.pattern.permute.xlu0 0
        %842 = vperm.xlu0 %841, %v840
        %v843 = vpop.permute.xlu0 %842
        %vm844 = vcmp.eq.s32.totalorder %v843, 1
        %v845 = vsel %vm844, %v837, %v599
        %v846 = vsel %vm844, %v837, 0.0
        %v847 = vpack.c.bf16 %v846, %v846
        %848 = vst [vmem:[%s311] sm:$0xf] %v847
        %v849 = vpack.c.bf16 %v845, %v845
        %850 = vmatprep.subr.bf16.mxu0 %v682
        %851 = vmatpush1.bf16.msra.mxu0 %v681
        %852 = vmatprep.subr.bf16.mxu0 %v685
        %853 = vmatpush1.bf16.msra.mxu0 %v684
        %854 = vmatprep.subr.bf16.mxu0 %v688
        %855 = vmatpush1.bf16.msra.mxu0 %v687
        %856 = vmatprep.subr.bf16.mxu0 %v691
        %857 = vmatpush1.bf16.msra.mxu0 %v690
        %858 = vmatprep.subr.bf16.mxu0 %v694
        %859 = vmatpush1.bf16.msra.mxu0 %v693
        %860 = vmatprep.subr.bf16.mxu0 %v697
        %861 = vmatpush1.bf16.msra.mxu0 %v696
        %862 = vmatprep.subr.bf16.mxu0 %v700
        %863 = vmatpush1.bf16.msra.mxu0 %v699
        %864 = vmatprep.subr.bf16.mxu0 %v703
        %865 = vmatpush1.bf16.msra.mxu0 %v702
        %866 = vmatprep.subr.bf16.mxu0 0
        %867 = vmatpush1.bf16.msra.mxu0 0
        %868 = vmatprep.subr.bf16.mxu0 0
        %869 = vmatpush1.bf16.msra.mxu0 0
        %870 = vmatprep.subr.bf16.mxu0 0
        %871 = vmatpush1.bf16.msra.mxu0 0
        %872 = vmatprep.subr.bf16.mxu0 0
        %873 = vmatpush1.bf16.msra.mxu0 0
        %874 = vmatprep.subr.bf16.mxu0 0
        %875 = vmatpush1.bf16.msra.mxu0 0
        %876 = vmatprep.subr.bf16.mxu0 0
        %877 = vmatpush1.bf16.msra.mxu0 0
        %878 = vmatprep.subr.bf16.mxu0 0
        %879 = vmatpush1.bf16.msra.mxu0 0
        %880 = vmatprep.subr.bf16.mxu0 0
        %881 = vmatpush1.bf16.msra.mxu0 0
        %882 = vmatprep.mubr.bf16.mxu0 0
        %883 = vmatmul.mubr.bf16.gmra.mrb[0].mxu0 %v849
        %v884 = vpop.f32.mrb[0].mxu0
        %v885 = vadd.f32 0.0, %v884
        %v886 = vpop.f32.mrb[0].mxu0
        %v887 = vadd.f32 0.0, %v886
        %v888 = vpop.f32.mrb[0].mxu0
        %v889 = vpop.f32.mrb[0].mxu0
        %890 = vdwg.mxu0
        %891 = vmatprep.subr.bf16.mxu0 0
        %892 = vmatpush1.bf16.msra.mxu0 %v683
        %893 = vmatprep.subr.bf16.mxu0 0
        %894 = vmatpush1.bf16.msra.mxu0 %v686
        %895 = vmatprep.subr.bf16.mxu0 0
        %896 = vmatpush1.bf16.msra.mxu0 %v689
        %897 = vmatprep.subr.bf16.mxu0 0
        %898 = vmatpush1.bf16.msra.mxu0 %v692
        %899 = vmatprep.subr.bf16.mxu0 0
        %900 = vmatpush1.bf16.msra.mxu0 %v695
        %901 = vmatprep.subr.bf16.mxu0 0
        %902 = vmatpush1.bf16.msra.mxu0 %v698
        %903 = vmatprep.subr.bf16.mxu0 0
        %904 = vmatpush1.bf16.msra.mxu0 %v701
        %905 = vmatprep.subr.bf16.mxu0 0
        %906 = vmatpush1.bf16.msra.mxu0 %v704
        %907 = vmatprep.subr.bf16.mxu0 0
        %908 = vmatpush1.bf16.msra.mxu0 0
        %909 = vmatprep.subr.bf16.mxu0 0
        %910 = vmatpush1.bf16.msra.mxu0 0
        %911 = vmatprep.subr.bf16.mxu0 0
        %912 = vmatpush1.bf16.msra.mxu0 0
        %913 = vmatprep.subr.bf16.mxu0 0
        %914 = vmatpush1.bf16.msra.mxu0 0
        %915 = vmatprep.subr.bf16.mxu0 0
        %916 = vmatpush1.bf16.msra.mxu0 0
        %917 = vmatprep.subr.bf16.mxu0 0
        %918 = vmatpush1.bf16.msra.mxu0 0
        %919 = vmatprep.subr.bf16.mxu0 0
        %920 = vmatpush1.bf16.msra.mxu0 0
        %921 = vmatprep.subr.bf16.mxu0 0
        %922 = vmatpush1.bf16.msra.mxu0 0
        %923 = vmatprep.mubr.bf16.mxu0 0
        %924 = vmatmul.mubr.bf16.gmra.mrb[0].mxu0 %v849
        %v925 = vpop.f32.mrb[0].mxu0
        %v926 = vadd.f32 0.0, %v925
        %v927 = vpop.f32.mrb[0].mxu0
        %v928 = vpop.f32.mrb[0].mxu0
        %v929 = vpop.f32.mrb[0].mxu0
        %930 = vdwg.mxu0
        %v931 = vadd.f32 %v498, %v885
        %v932 = vxor.u32 %v931, 2147483648
        %v933 = vmul.f32 %v932, 1.442695
        %v934 = vpow.pop %v933
        %v935 = vadd.f32 %v934, 1.0
        %v936 = vrcp.pop %v935
        %v937 = vmul.f32 1.0, %v936
        %v938 = vadd.f32 %v500, %v887
        %v939 = vxor.u32 %v938, 2147483648
        %v940 = vmul.f32 %v939, 1.442695
        %v941 = vpow.pop %v940
        %v942 = vadd.f32 %v941, 1.0
        %v943 = vrcp.pop %v942
        %v944 = vmul.f32 1.0, %v943
        %v945 = vadd.f32 %v926, %v828
        %v946 = vmul.f32 %v937, %v945
        %v947 = vadd.f32 %v570, %v946
        %v948 = vtanh.pop %v947
        %v949 = vsub.f32 1.0, %v944
        %v950 = vmul.f32 %v949, %v948
        %v951 = vmul.f32 %v944, %v845
        %v952 = vadd.f32 %v950, %v951
        %s953 = sadd.s32 %s598, 1
        %v954 = vstv %s953
        %vm955 = vcmp.lt.s32.totalorder %v954, %v597
        %v956 = vsel %vm955, 1, 0
        %957 = vset.pattern.permute.xlu0 0
        %958 = vperm.xlu0 %957, %v956
        %v959 = vpop.permute.xlu0 %958
        %vm960 = vcmp.eq.s32.totalorder %v959, 1
        %v961 = vsel %vm960, %v952, %v845
        %v962 = vsel %vm960, %v952, 0.0
        %v963 = vpack.c.bf16 %v962, %v962
        %964 = vst [vmem:[%s311 + $0x4] sm:$0xf] %v963
        %v965 = vpack.c.bf16 %v961, %v961
        %966 = vmatprep.subr.bf16.mxu0 %v682
        %967 = vmatpush1.bf16.msra.mxu0 %v681
        %968 = vmatprep.subr.bf16.mxu0 %v685
        %969 = vmatpush1.bf16.msra.mxu0 %v684
        %970 = vmatprep.subr.bf16.mxu0 %v688
        %971 = vmatpush1.bf16.msra.mxu0 %v687
        %972 = vmatprep.subr.bf16.mxu0 %v691
        %973 = vmatpush1.bf16.msra.mxu0 %v690
        %974 = vmatprep.subr.bf16.mxu0 %v694
        %975 = vmatpush1.bf16.msra.mxu0 %v693
        %976 = vmatprep.subr.bf16.mxu0 %v697
        %977 = vmatpush1.bf16.msra.mxu0 %v696
        %978 = vmatprep.subr.bf16.mxu0 %v700
        %979 = vmatpush1.bf16.msra.mxu0 %v699
        %980 = vmatprep.subr.bf16.mxu0 %v703
        %981 = vmatpush1.bf16.msra.mxu0 %v702
        %982 = vmatprep.subr.bf16.mxu0 0
        %983 = vmatpush1.bf16.msra.mxu0 0
        %984 = vmatprep.subr.bf16.mxu0 0
        %985 = vmatpush1.bf16.msra.mxu0 0
        %986 = vmatprep.subr.bf16.mxu0 0
        %987 = vmatpush1.bf16.msra.mxu0 0
        %988 = vmatprep.subr.bf16.mxu0 0
        %989 = vmatpush1.bf16.msra.mxu0 0
        %990 = vmatprep.subr.bf16.mxu0 0
        %991 = vmatpush1.bf16.msra.mxu0 0
        %992 = vmatprep.subr.bf16.mxu0 0
        %993 = vmatpush1.bf16.msra.mxu0 0
        %994 = vmatprep.subr.bf16.mxu0 0
        %995 = vmatpush1.bf16.msra.mxu0 0
        %996 = vmatprep.subr.bf16.mxu0 0
        %997 = vmatpush1.bf16.msra.mxu0 0
        %998 = vmatprep.mubr.bf16.mxu0 0
        %999 = vmatmul.mubr.bf16.gmra.mrb[0].mxu0 %v965
        %v1000 = vpop.f32.mrb[0].mxu0
        %v1001 = vadd.f32 0.0, %v1000
        %v1002 = vpop.f32.mrb[0].mxu0
        %v1003 = vadd.f32 0.0, %v1002
        %v1004 = vpop.f32.mrb[0].mxu0
        %v1005 = vpop.f32.mrb[0].mxu0
        %1006 = vdwg.mxu0
        %1007 = vmatprep.subr.bf16.mxu0 0
        %1008 = vmatpush1.bf16.msra.mxu0 %v683
        %1009 = vmatprep.subr.bf16.mxu0 0
        %1010 = vmatpush1.bf16.msra.mxu0 %v686
        %1011 = vmatprep.subr.bf16.mxu0 0
        %1012 = vmatpush1.bf16.msra.mxu0 %v689
        %1013 = vmatprep.subr.bf16.mxu0 0
        %1014 = vmatpush1.bf16.msra.mxu0 %v692
        %1015 = vmatprep.subr.bf16.mxu0 0
        %1016 = vmatpush1.bf16.msra.mxu0 %v695
        %1017 = vmatprep.subr.bf16.mxu0 0
        %1018 = vmatpush1.bf16.msra.mxu0 %v698
        %1019 = vmatprep.subr.bf16.mxu0 0
        %1020 = vmatpush1.bf16.msra.mxu0 %v701
        %1021 = vmatprep.subr.bf16.mxu0 0
        %1022 = vmatpush1.bf16.msra.mxu0 %v704
        %1023 = vmatprep.subr.bf16.mxu0 0
        %1024 = vmatpush1.bf16.msra.mxu0 0
        %1025 = vmatprep.subr.bf16.mxu0 0
        %1026 = vmatpush1.bf16.msra.mxu0 0
        %1027 = vmatprep.subr.bf16.mxu0 0
        %1028 = vmatpush1.bf16.msra.mxu0 0
        %1029 = vmatprep.subr.bf16.mxu0 0
        %1030 = vmatpush1.bf16.msra.mxu0 0
        %1031 = vmatprep.subr.bf16.mxu0 0
        %1032 = vmatpush1.bf16.msra.mxu0 0
        %1033 = vmatprep.subr.bf16.mxu0 0
        %1034 = vmatpush1.bf16.msra.mxu0 0
        %1035 = vmatprep.subr.bf16.mxu0 0
        %1036 = vmatpush1.bf16.msra.mxu0 0
        %1037 = vmatprep.subr.bf16.mxu0 0
        %1038 = vmatpush1.bf16.msra.mxu0 0
        %1039 = vmatprep.mubr.bf16.mxu0 0
        %1040 = vmatmul.mubr.bf16.gmra.mrb[0].mxu0 %v965
        %v1041 = vpop.f32.mrb[0].mxu0
        %v1042 = vadd.f32 0.0, %v1041
        %v1043 = vpop.f32.mrb[0].mxu0
        %v1044 = vpop.f32.mrb[0].mxu0
        %v1045 = vpop.f32.mrb[0].mxu0
        %1046 = vdwg.mxu0
        %v1047 = vadd.f32 %v504, %v1001
        %v1048 = vxor.u32 %v1047, 2147483648
        %v1049 = vmul.f32 %v1048, 1.442695
        %v1050 = vpow.pop %v1049
        %v1051 = vadd.f32 %v1050, 1.0
        %v1052 = vrcp.pop %v1051
        %v1053 = vmul.f32 1.0, %v1052
        %v1054 = vadd.f32 %v506, %v1003
        %v1055 = vxor.u32 %v1054, 2147483648
        %v1056 = vmul.f32 %v1055, 1.442695
        %v1057 = vpow.pop %v1056
        %v1058 = vadd.f32 %v1057, 1.0
        %v1059 = vrcp.pop %v1058
        %v1060 = vmul.f32 1.0, %v1059
        %v1061 = vadd.f32 %v1042, %v828
        %v1062 = vmul.f32 %v1053, %v1061
        %v1063 = vadd.f32 %v575, %v1062
        %v1064 = vtanh.pop %v1063
        %v1065 = vsub.f32 1.0, %v1060
        %v1066 = vmul.f32 %v1065, %v1064
        %v1067 = vmul.f32 %v1060, %v961
        %v1068 = vadd.f32 %v1066, %v1067
        %s1069 = sadd.s32 %s598, 2
        %v1070 = vstv %s1069
        %vm1071 = vcmp.lt.s32.totalorder %v1070, %v597
        %v1072 = vsel %vm1071, 1, 0
        %1073 = vset.pattern.permute.xlu0 0
        %1074 = vperm.xlu0 %1073, %v1072
        %v1075 = vpop.permute.xlu0 %1074
        %vm1076 = vcmp.eq.s32.totalorder %v1075, 1
        %v1077 = vsel %vm1076, %v1068, %v961
        %v1078 = vsel %vm1076, %v1068, 0.0
        %v1079 = vpack.c.bf16 %v1078, %v1078
        %1080 = vst [vmem:[%s311 + $0x8] sm:$0xf] %v1079
        %v1081 = vpack.c.bf16 %v1077, %v1077
        %1082 = vmatprep.subr.bf16.mxu0 %v682
        %1083 = vmatpush1.bf16.msra.mxu0 %v681
        %1084 = vmatprep.subr.bf16.mxu0 %v685
        %1085 = vmatpush1.bf16.msra.mxu0 %v684
        %1086 = vmatprep.subr.bf16.mxu0 %v688
        %1087 = vmatpush1.bf16.msra.mxu0 %v687
        %1088 = vmatprep.subr.bf16.mxu0 %v691
        %1089 = vmatpush1.bf16.msra.mxu0 %v690
        %1090 = vmatprep.subr.bf16.mxu0 %v694
        %1091 = vmatpush1.bf16.msra.mxu0 %v693
        %1092 = vmatprep.subr.bf16.mxu0 %v697
        %1093 = vmatpush1.bf16.msra.mxu0 %v696
        %1094 = vmatprep.subr.bf16.mxu0 %v700
        %1095 = vmatpush1.bf16.msra.mxu0 %v699
        %1096 = vmatprep.subr.bf16.mxu0 %v703
        %1097 = vmatpush1.bf16.msra.mxu0 %v702
        %1098 = vmatprep.subr.bf16.mxu0 0
        %1099 = vmatpush1.bf16.msra.mxu0 0
        %1100 = vmatprep.subr.bf16.mxu0 0
        %1101 = vmatpush1.bf16.msra.mxu0 0
        %1102 = vmatprep.subr.bf16.mxu0 0
        %1103 = vmatpush1.bf16.msra.mxu0 0
        %1104 = vmatprep.subr.bf16.mxu0 0
        %1105 = vmatpush1.bf16.msra.mxu0 0
        %1106 = vmatprep.subr.bf16.mxu0 0
        %1107 = vmatpush1.bf16.msra.mxu0 0
        %1108 = vmatprep.subr.bf16.mxu0 0
        %1109 = vmatpush1.bf16.msra.mxu0 0
        %1110 = vmatprep.subr.bf16.mxu0 0
        %1111 = vmatpush1.bf16.msra.mxu0 0
        %1112 = vmatprep.subr.bf16.mxu0 0
        %1113 = vmatpush1.bf16.msra.mxu0 0
        %1114 = vmatprep.mubr.bf16.mxu0 0
        %1115 = vmatmul.mubr.bf16.gmra.mrb[0].mxu0 %v1081
        %v1116 = vpop.f32.mrb[0].mxu0
        %v1117 = vadd.f32 0.0, %v1116
        %v1118 = vpop.f32.mrb[0].mxu0
        %v1119 = vadd.f32 0.0, %v1118
        %v1120 = vpop.f32.mrb[0].mxu0
        %v1121 = vpop.f32.mrb[0].mxu0
        %1122 = vdwg.mxu0
        %1123 = vmatprep.subr.bf16.mxu0 0
        %1124 = vmatpush1.bf16.msra.mxu0 %v683
        %1125 = vmatprep.subr.bf16.mxu0 0
        %1126 = vmatpush1.bf16.msra.mxu0 %v686
        %1127 = vmatprep.subr.bf16.mxu0 0
        %1128 = vmatpush1.bf16.msra.mxu0 %v689
        %1129 = vmatprep.subr.bf16.mxu0 0
        %1130 = vmatpush1.bf16.msra.mxu0 %v692
        %1131 = vmatprep.subr.bf16.mxu0 0
        %1132 = vmatpush1.bf16.msra.mxu0 %v695
        %1133 = vmatprep.subr.bf16.mxu0 0
        %1134 = vmatpush1.bf16.msra.mxu0 %v698
        %1135 = vmatprep.subr.bf16.mxu0 0
        %1136 = vmatpush1.bf16.msra.mxu0 %v701
        %1137 = vmatprep.subr.bf16.mxu0 0
        %1138 = vmatpush1.bf16.msra.mxu0 %v704
        %1139 = vmatprep.subr.bf16.mxu0 0
        %1140 = vmatpush1.bf16.msra.mxu0 0
        %1141 = vmatprep.subr.bf16.mxu0 0
        %1142 = vmatpush1.bf16.msra.mxu0 0
        %1143 = vmatprep.subr.bf16.mxu0 0
        %1144 = vmatpush1.bf16.msra.mxu0 0
        %1145 = vmatprep.subr.bf16.mxu0 0
        %1146 = vmatpush1.bf16.msra.mxu0 0
        %1147 = vmatprep.subr.bf16.mxu0 0
        %1148 = vmatpush1.bf16.msra.mxu0 0
        %1149 = vmatprep.subr.bf16.mxu0 0
        %1150 = vmatpush1.bf16.msra.mxu0 0
        %1151 = vmatprep.subr.bf16.mxu0 0
        %1152 = vmatpush1.bf16.msra.mxu0 0
        %1153 = vmatprep.subr.bf16.mxu0 0
        %1154 = vmatpush1.bf16.msra.mxu0 0
        %1155 = vmatprep.mubr.bf16.mxu0 0
        %1156 = vmatmul.mubr.bf16.gmra.mrb[0].mxu0 %v1081
        %v1157 = vpop.f32.mrb[0].mxu0
        %v1158 = vadd.f32 0.0, %v1157
        %v1159 = vpop.f32.mrb[0].mxu0
        %v1160 = vpop.f32.mrb[0].mxu0
        %v1161 = vpop.f32.mrb[0].mxu0
        %1162 = vdwg.mxu0
        %v1163 = vadd.f32 %v508, %v1117
        %v1164 = vxor.u32 %v1163, 2147483648
        %v1165 = vmul.f32 %v1164, 1.442695
        %v1166 = vpow.pop %v1165
        %v1167 = vadd.f32 %v1166, 1.0
        %v1168 = vrcp.pop %v1167
        %v1169 = vmul.f32 1.0, %v1168
        %v1170 = vadd.f32 %v510, %v1119
        %v1171 = vxor.u32 %v1170, 2147483648
        %v1172 = vmul.f32 %v1171, 1.442695
        %v1173 = vpow.pop %v1172
        %v1174 = vadd.f32 %v1173, 1.0
        %v1175 = vrcp.pop %v1174
        %v1176 = vmul.f32 1.0, %v1175
        %v1177 = vadd.f32 %v1158, %v828
        %v1178 = vmul.f32 %v1169, %v1177
        %v1179 = vadd.f32 %v578, %v1178
        %v1180 = vtanh.pop %v1179
        %v1181 = vsub.f32 1.0, %v1176
        %v1182 = vmul.f32 %v1181, %v1180
        %v1183 = vmul.f32 %v1176, %v1077
        %v1184 = vadd.f32 %v1182, %v1183
        %s1185 = sadd.s32 %s598, 3
        %v1186 = vstv %s1185
        %vm1187 = vcmp.lt.s32.totalorder %v1186, %v597
        %v1188 = vsel %vm1187, 1, 0
        %1189 = vset.pattern.permute.xlu0 0
        %1190 = vperm.xlu0 %1189, %v1188
        %v1191 = vpop.permute.xlu0 %1190
        %vm1192 = vcmp.eq.s32.totalorder %v1191, 1
        %v1193 = vsel %vm1192, %v1184, %v1077
        %v1194 = vsel %vm1192, %v1184, 0.0
        %v1195 = vpack.c.bf16 %v1194, %v1194
        %1196 = vst [vmem:[%s311 + $0xc] sm:$0xf] %v1195
        %v1197 = vpack.c.bf16 %v1193, %v1193
        %1198 = vmatprep.subr.bf16.mxu0 %v682
        %1199 = vmatpush1.bf16.msra.mxu0 %v681
        %1200 = vmatprep.subr.bf16.mxu0 %v685
        %1201 = vmatpush1.bf16.msra.mxu0 %v684
        %1202 = vmatprep.subr.bf16.mxu0 %v688
        %1203 = vmatpush1.bf16.msra.mxu0 %v687
        %1204 = vmatprep.subr.bf16.mxu0 %v691
        %1205 = vmatpush1.bf16.msra.mxu0 %v690
        %1206 = vmatprep.subr.bf16.mxu0 %v694
        %1207 = vmatpush1.bf16.msra.mxu0 %v693
        %1208 = vmatprep.subr.bf16.mxu0 %v697
        %1209 = vmatpush1.bf16.msra.mxu0 %v696
        %1210 = vmatprep.subr.bf16.mxu0 %v700
        %1211 = vmatpush1.bf16.msra.mxu0 %v699
        %1212 = vmatprep.subr.bf16.mxu0 %v703
        %1213 = vmatpush1.bf16.msra.mxu0 %v702
        %1214 = vmatprep.subr.bf16.mxu0 0
        %1215 = vmatpush1.bf16.msra.mxu0 0
        %1216 = vmatprep.subr.bf16.mxu0 0
        %1217 = vmatpush1.bf16.msra.mxu0 0
        %1218 = vmatprep.subr.bf16.mxu0 0
        %1219 = vmatpush1.bf16.msra.mxu0 0
        %1220 = vmatprep.subr.bf16.mxu0 0
        %1221 = vmatpush1.bf16.msra.mxu0 0
        %1222 = vmatprep.subr.bf16.mxu0 0
        %1223 = vmatpush1.bf16.msra.mxu0 0
        %1224 = vmatprep.subr.bf16.mxu0 0
        %1225 = vmatpush1.bf16.msra.mxu0 0
        %1226 = vmatprep.subr.bf16.mxu0 0
        %1227 = vmatpush1.bf16.msra.mxu0 0
        %1228 = vmatprep.subr.bf16.mxu0 0
        %1229 = vmatpush1.bf16.msra.mxu0 0
        %1230 = vmatprep.mubr.bf16.mxu0 0
        %1231 = vmatmul.mubr.bf16.gmra.mrb[0].mxu0 %v1197
        %v1232 = vpop.f32.mrb[0].mxu0
        %v1233 = vadd.f32 0.0, %v1232
        %v1234 = vpop.f32.mrb[0].mxu0
        %v1235 = vadd.f32 0.0, %v1234
        %v1236 = vpop.f32.mrb[0].mxu0
        %v1237 = vpop.f32.mrb[0].mxu0
        %1238 = vdwg.mxu0
        %1239 = vmatprep.subr.bf16.mxu0 0
        %1240 = vmatpush1.bf16.msra.mxu0 %v683
        %1241 = vmatprep.subr.bf16.mxu0 0
        %1242 = vmatpush1.bf16.msra.mxu0 %v686
        %1243 = vmatprep.subr.bf16.mxu0 0
        %1244 = vmatpush1.bf16.msra.mxu0 %v689
        %1245 = vmatprep.subr.bf16.mxu0 0
        %1246 = vmatpush1.bf16.msra.mxu0 %v692
        %1247 = vmatprep.subr.bf16.mxu0 0
        %1248 = vmatpush1.bf16.msra.mxu0 %v695
        %1249 = vmatprep.subr.bf16.mxu0 0
        %1250 = vmatpush1.bf16.msra.mxu0 %v698
        %1251 = vmatprep.subr.bf16.mxu0 0
        %1252 = vmatpush1.bf16.msra.mxu0 %v701
        %1253 = vmatprep.subr.bf16.mxu0 0
        %1254 = vmatpush1.bf16.msra.mxu0 %v704
        %1255 = vmatprep.subr.bf16.mxu0 0
        %1256 = vmatpush1.bf16.msra.mxu0 0
        %1257 = vmatprep.subr.bf16.mxu0 0
        %1258 = vmatpush1.bf16.msra.mxu0 0
        %1259 = vmatprep.subr.bf16.mxu0 0
        %1260 = vmatpush1.bf16.msra.mxu0 0
        %1261 = vmatprep.subr.bf16.mxu0 0
        %1262 = vmatpush1.bf16.msra.mxu0 0
        %1263 = vmatprep.subr.bf16.mxu0 0
        %1264 = vmatpush1.bf16.msra.mxu0 0
        %1265 = vmatprep.subr.bf16.mxu0 0
        %1266 = vmatpush1.bf16.msra.mxu0 0
        %1267 = vmatprep.subr.bf16.mxu0 0
        %1268 = vmatpush1.bf16.msra.mxu0 0
        %1269 = vmatprep.subr.bf16.mxu0 0
        %1270 = vmatpush1.bf16.msra.mxu0 0
        %1271 = vmatprep.mubr.bf16.mxu0 0
        %1272 = vmatmul.mubr.bf16.gmra.mrb[0].mxu0 %v1197
        %v1273 = vpop.f32.mrb[0].mxu0
        %v1274 = vadd.f32 0.0, %v1273
        %v1275 = vpop.f32.mrb[0].mxu0
        %v1276 = vpop.f32.mrb[0].mxu0
        %v1277 = vpop.f32.mrb[0].mxu0
        %1278 = vdwg.mxu0
        %v1279 = vadd.f32 %v514, %v1233
        %v1280 = vxor.u32 %v1279, 2147483648
        %v1281 = vmul.f32 %v1280, 1.442695
        %v1282 = vpow.pop %v1281
        %v1283 = vadd.f32 %v1282, 1.0
        %v1284 = vrcp.pop %v1283
        %v1285 = vmul.f32 1.0, %v1284
        %v1286 = vadd.f32 %v516, %v1235
        %v1287 = vxor.u32 %v1286, 2147483648
        %v1288 = vmul.f32 %v1287, 1.442695
        %v1289 = vpow.pop %v1288
        %v1290 = vadd.f32 %v1289, 1.0
        %v1291 = vrcp.pop %v1290
        %v1292 = vmul.f32 1.0, %v1291
        %v1293 = vadd.f32 %v1274, %v828
        %v1294 = vmul.f32 %v1285, %v1293
        %v1295 = vadd.f32 %v583, %v1294
        %v1296 = vtanh.pop %v1295
        %v1297 = vsub.f32 1.0, %v1292
        %v1298 = vmul.f32 %v1297, %v1296
        %v1299 = vmul.f32 %v1292, %v1193
        %v1300 = vadd.f32 %v1298, %v1299
        %s1301 = sadd.s32 %s598, 4
        %v1302 = vstv %s1301
        %vm1303 = vcmp.lt.s32.totalorder %v1302, %v597
        %v1304 = vsel %vm1303, 1, 0
        %1305 = vset.pattern.permute.xlu0 0
        %1306 = vperm.xlu0 %1305, %v1304
        %v1307 = vpop.permute.xlu0 %1306
        %vm1308 = vcmp.eq.s32.totalorder %v1307, 1
        %v1309 = vsel %vm1308, %v1300, %v1193
        %v1310 = vsel %vm1308, %v1300, 0.0
        %v1311 = vpack.c.bf16 %v1310, %v1310
        %1312 = vst [vmem:[%s311 + $0x10] sm:$0xf] %v1311
        %v1313 = vpack.c.bf16 %v1309, %v1309
        %1314 = vmatprep.subr.bf16.mxu0 %v682
        %1315 = vmatpush1.bf16.msra.mxu0 %v681
        %1316 = vmatprep.subr.bf16.mxu0 %v685
        %1317 = vmatpush1.bf16.msra.mxu0 %v684
        %1318 = vmatprep.subr.bf16.mxu0 %v688
        %1319 = vmatpush1.bf16.msra.mxu0 %v687
        %1320 = vmatprep.subr.bf16.mxu0 %v691
        %1321 = vmatpush1.bf16.msra.mxu0 %v690
        %1322 = vmatprep.subr.bf16.mxu0 %v694
        %1323 = vmatpush1.bf16.msra.mxu0 %v693
        %1324 = vmatprep.subr.bf16.mxu0 %v697
        %1325 = vmatpush1.bf16.msra.mxu0 %v696
        %1326 = vmatprep.subr.bf16.mxu0 %v700
        %1327 = vmatpush1.bf16.msra.mxu0 %v699
        %1328 = vmatprep.subr.bf16.mxu0 %v703
        %1329 = vmatpush1.bf16.msra.mxu0 %v702
        %1330 = vmatprep.subr.bf16.mxu0 0
        %1331 = vmatpush1.bf16.msra.mxu0 0
        %1332 = vmatprep.subr.bf16.mxu0 0
        %1333 = vmatpush1.bf16.msra.mxu0 0
        %1334 = vmatprep.subr.bf16.mxu0 0
        %1335 = vmatpush1.bf16.msra.mxu0 0
        %1336 = vmatprep.subr.bf16.mxu0 0
        %1337 = vmatpush1.bf16.msra.mxu0 0
        %1338 = vmatprep.subr.bf16.mxu0 0
        %1339 = vmatpush1.bf16.msra.mxu0 0
        %1340 = vmatprep.subr.bf16.mxu0 0
        %1341 = vmatpush1.bf16.msra.mxu0 0
        %1342 = vmatprep.subr.bf16.mxu0 0
        %1343 = vmatpush1.bf16.msra.mxu0 0
        %1344 = vmatprep.subr.bf16.mxu0 0
        %1345 = vmatpush1.bf16.msra.mxu0 0
        %1346 = vmatprep.mubr.bf16.mxu0 0
        %1347 = vmatmul.mubr.bf16.gmra.mrb[0].mxu0 %v1313
        %v1348 = vpop.f32.mrb[0].mxu0
        %v1349 = vadd.f32 0.0, %v1348
        %v1350 = vpop.f32.mrb[0].mxu0
        %v1351 = vadd.f32 0.0, %v1350
        %v1352 = vpop.f32.mrb[0].mxu0
        %v1353 = vpop.f32.mrb[0].mxu0
        %1354 = vdwg.mxu0
        %1355 = vmatprep.subr.bf16.mxu0 0
        %1356 = vmatpush1.bf16.msra.mxu0 %v683
        %1357 = vmatprep.subr.bf16.mxu0 0
        %1358 = vmatpush1.bf16.msra.mxu0 %v686
        %1359 = vmatprep.subr.bf16.mxu0 0
        %1360 = vmatpush1.bf16.msra.mxu0 %v689
        %1361 = vmatprep.subr.bf16.mxu0 0
        %1362 = vmatpush1.bf16.msra.mxu0 %v692
        %1363 = vmatprep.subr.bf16.mxu0 0
        %1364 = vmatpush1.bf16.msra.mxu0 %v695
        %1365 = vmatprep.subr.bf16.mxu0 0
        %1366 = vmatpush1.bf16.msra.mxu0 %v698
        %1367 = vmatprep.subr.bf16.mxu0 0
        %1368 = vmatpush1.bf16.msra.mxu0 %v701
        %1369 = vmatprep.subr.bf16.mxu0 0
        %1370 = vmatpush1.bf16.msra.mxu0 %v704
        %1371 = vmatprep.subr.bf16.mxu0 0
        %1372 = vmatpush1.bf16.msra.mxu0 0
        %1373 = vmatprep.subr.bf16.mxu0 0
        %1374 = vmatpush1.bf16.msra.mxu0 0
        %1375 = vmatprep.subr.bf16.mxu0 0
        %1376 = vmatpush1.bf16.msra.mxu0 0
        %1377 = vmatprep.subr.bf16.mxu0 0
        %1378 = vmatpush1.bf16.msra.mxu0 0
        %1379 = vmatprep.subr.bf16.mxu0 0
        %1380 = vmatpush1.bf16.msra.mxu0 0
        %1381 = vmatprep.subr.bf16.mxu0 0
        %1382 = vmatpush1.bf16.msra.mxu0 0
        %1383 = vmatprep.subr.bf16.mxu0 0
        %1384 = vmatpush1.bf16.msra.mxu0 0
        %1385 = vmatprep.subr.bf16.mxu0 0
        %1386 = vmatpush1.bf16.msra.mxu0 0
        %1387 = vmatprep.mubr.bf16.mxu0 0
        %1388 = vmatmul.mubr.bf16.gmra.mrb[0].mxu0 %v1313
        %v1389 = vpop.f32.mrb[0].mxu0
        %v1390 = vadd.f32 0.0, %v1389
        %v1391 = vpop.f32.mrb[0].mxu0
        %v1392 = vpop.f32.mrb[0].mxu0
        %v1393 = vpop.f32.mrb[0].mxu0
        %1394 = vdwg.mxu0
        %v1395 = vadd.f32 %v518, %v1349
        %v1396 = vxor.u32 %v1395, 2147483648
        %v1397 = vmul.f32 %v1396, 1.442695
        %v1398 = vpow.pop %v1397
        %v1399 = vadd.f32 %v1398, 1.0
        %v1400 = vrcp.pop %v1399
        %v1401 = vmul.f32 1.0, %v1400
        %v1402 = vadd.f32 %v520, %v1351
        %v1403 = vxor.u32 %v1402, 2147483648
        %v1404 = vmul.f32 %v1403, 1.442695
        %v1405 = vpow.pop %v1404
        %v1406 = vadd.f32 %v1405, 1.0
        %v1407 = vrcp.pop %v1406
        %v1408 = vmul.f32 1.0, %v1407
        %v1409 = vadd.f32 %v1390, %v828
        %v1410 = vmul.f32 %v1401, %v1409
        %v1411 = vadd.f32 %v586, %v1410
        %v1412 = vtanh.pop %v1411
        %v1413 = vsub.f32 1.0, %v1408
        %v1414 = vmul.f32 %v1413, %v1412
        %v1415 = vmul.f32 %v1408, %v1309
        %v1416 = vadd.f32 %v1414, %v1415
        %s1417 = sadd.s32 %s598, 5
        %v1418 = vstv %s1417
        %vm1419 = vcmp.lt.s32.totalorder %v1418, %v597
        %v1420 = vsel %vm1419, 1, 0
        %1421 = vset.pattern.permute.xlu0 0
        %1422 = vperm.xlu0 %1421, %v1420
        %v1423 = vpop.permute.xlu0 %1422
        %vm1424 = vcmp.eq.s32.totalorder %v1423, 1
        %v1425 = vsel %vm1424, %v1416, %v1309
        %v1426 = vsel %vm1424, %v1416, 0.0
        %v1427 = vpack.c.bf16 %v1426, %v1426
        %1428 = vst [vmem:[%s311 + $0x14] sm:$0xf] %v1427
        %v1429 = vpack.c.bf16 %v1425, %v1425
        %1430 = vmatprep.subr.bf16.mxu0 %v682
        %1431 = vmatpush1.bf16.msra.mxu0 %v681
        %1432 = vmatprep.subr.bf16.mxu0 %v685
        %1433 = vmatpush1.bf16.msra.mxu0 %v684
        %1434 = vmatprep.subr.bf16.mxu0 %v688
        %1435 = vmatpush1.bf16.msra.mxu0 %v687
        %1436 = vmatprep.subr.bf16.mxu0 %v691
        %1437 = vmatpush1.bf16.msra.mxu0 %v690
        %1438 = vmatprep.subr.bf16.mxu0 %v694
        %1439 = vmatpush1.bf16.msra.mxu0 %v693
        %1440 = vmatprep.subr.bf16.mxu0 %v697
        %1441 = vmatpush1.bf16.msra.mxu0 %v696
        %1442 = vmatprep.subr.bf16.mxu0 %v700
        %1443 = vmatpush1.bf16.msra.mxu0 %v699
        %1444 = vmatprep.subr.bf16.mxu0 %v703
        %1445 = vmatpush1.bf16.msra.mxu0 %v702
        %1446 = vmatprep.subr.bf16.mxu0 0
        %1447 = vmatpush1.bf16.msra.mxu0 0
        %1448 = vmatprep.subr.bf16.mxu0 0
        %1449 = vmatpush1.bf16.msra.mxu0 0
        %1450 = vmatprep.subr.bf16.mxu0 0
        %1451 = vmatpush1.bf16.msra.mxu0 0
        %1452 = vmatprep.subr.bf16.mxu0 0
        %1453 = vmatpush1.bf16.msra.mxu0 0
        %1454 = vmatprep.subr.bf16.mxu0 0
        %1455 = vmatpush1.bf16.msra.mxu0 0
        %1456 = vmatprep.subr.bf16.mxu0 0
        %1457 = vmatpush1.bf16.msra.mxu0 0
        %1458 = vmatprep.subr.bf16.mxu0 0
        %1459 = vmatpush1.bf16.msra.mxu0 0
        %1460 = vmatprep.subr.bf16.mxu0 0
        %1461 = vmatpush1.bf16.msra.mxu0 0
        %1462 = vmatprep.mubr.bf16.mxu0 0
        %1463 = vmatmul.mubr.bf16.gmra.mrb[0].mxu0 %v1429
        %v1464 = vpop.f32.mrb[0].mxu0
        %v1465 = vadd.f32 0.0, %v1464
        %v1466 = vpop.f32.mrb[0].mxu0
        %v1467 = vadd.f32 0.0, %v1466
        %v1468 = vpop.f32.mrb[0].mxu0
        %v1469 = vpop.f32.mrb[0].mxu0
        %1470 = vdwg.mxu0
        %1471 = vmatprep.subr.bf16.mxu0 0
        %1472 = vmatpush1.bf16.msra.mxu0 %v683
        %1473 = vmatprep.subr.bf16.mxu0 0
        %1474 = vmatpush1.bf16.msra.mxu0 %v686
        %1475 = vmatprep.subr.bf16.mxu0 0
        %1476 = vmatpush1.bf16.msra.mxu0 %v689
        %1477 = vmatprep.subr.bf16.mxu0 0
        %1478 = vmatpush1.bf16.msra.mxu0 %v692
        %1479 = vmatprep.subr.bf16.mxu0 0
        %1480 = vmatpush1.bf16.msra.mxu0 %v695
        %1481 = vmatprep.subr.bf16.mxu0 0
        %1482 = vmatpush1.bf16.msra.mxu0 %v698
        %1483 = vmatprep.subr.bf16.mxu0 0
        %1484 = vmatpush1.bf16.msra.mxu0 %v701
        %1485 = vmatprep.subr.bf16.mxu0 0
        %1486 = vmatpush1.bf16.msra.mxu0 %v704
        %1487 = vmatprep.subr.bf16.mxu0 0
        %1488 = vmatpush1.bf16.msra.mxu0 0
        %1489 = vmatprep.subr.bf16.mxu0 0
        %1490 = vmatpush1.bf16.msra.mxu0 0
        %1491 = vmatprep.subr.bf16.mxu0 0
        %1492 = vmatpush1.bf16.msra.mxu0 0
        %1493 = vmatprep.subr.bf16.mxu0 0
        %1494 = vmatpush1.bf16.msra.mxu0 0
        %1495 = vmatprep.subr.bf16.mxu0 0
        %1496 = vmatpush1.bf16.msra.mxu0 0
        %1497 = vmatprep.subr.bf16.mxu0 0
        %1498 = vmatpush1.bf16.msra.mxu0 0
        %1499 = vmatprep.subr.bf16.mxu0 0
        %1500 = vmatpush1.bf16.msra.mxu0 0
        %1501 = vmatprep.subr.bf16.mxu0 0
        %1502 = vmatpush1.bf16.msra.mxu0 0
        %1503 = vmatprep.mubr.bf16.mxu0 0
        %1504 = vmatmul.mubr.bf16.gmra.mrb[0].mxu0 %v1429
        %v1505 = vpop.f32.mrb[0].mxu0
        %v1506 = vadd.f32 0.0, %v1505
        %v1507 = vpop.f32.mrb[0].mxu0
        %v1508 = vpop.f32.mrb[0].mxu0
        %v1509 = vpop.f32.mrb[0].mxu0
        %1510 = vdwg.mxu0
        %v1511 = vadd.f32 %v524, %v1465
        %v1512 = vxor.u32 %v1511, 2147483648
        %v1513 = vmul.f32 %v1512, 1.442695
        %v1514 = vpow.pop %v1513
        %v1515 = vadd.f32 %v1514, 1.0
        %v1516 = vrcp.pop %v1515
        %v1517 = vmul.f32 1.0, %v1516
        %v1518 = vadd.f32 %v526, %v1467
        %v1519 = vxor.u32 %v1518, 2147483648
        %v1520 = vmul.f32 %v1519, 1.442695
        %v1521 = vpow.pop %v1520
        %v1522 = vadd.f32 %v1521, 1.0
        %v1523 = vrcp.pop %v1522
        %v1524 = vmul.f32 1.0, %v1523
        %v1525 = vadd.f32 %v1506, %v828
        %v1526 = vmul.f32 %v1517, %v1525
        %v1527 = vadd.f32 %v591, %v1526
        %v1528 = vtanh.pop %v1527
        %v1529 = vsub.f32 1.0, %v1524
        %v1530 = vmul.f32 %v1529, %v1528
        %v1531 = vmul.f32 %v1524, %v1425
        %v1532 = vadd.f32 %v1530, %v1531
        %s1533 = sadd.s32 %s598, 6
        %v1534 = vstv %s1533
        %vm1535 = vcmp.lt.s32.totalorder %v1534, %v597
        %v1536 = vsel %vm1535, 1, 0
        %1537 = vset.pattern.permute.xlu0 0
        %1538 = vperm.xlu0 %1537, %v1536
        %v1539 = vpop.permute.xlu0 %1538
        %vm1540 = vcmp.eq.s32.totalorder %v1539, 1
        %v1541 = vsel %vm1540, %v1532, %v1425
        %v1542 = vsel %vm1540, %v1532, 0.0
        %v1543 = vpack.c.bf16 %v1542, %v1542
        %1544 = vst [vmem:[%s311 + $0x18] sm:$0xf] %v1543
        %v1545 = vpack.c.bf16 %v1541, %v1541
        %1546 = vmatprep.subr.bf16.mxu0 %v682
        %1547 = vmatpush1.bf16.msra.mxu0 %v681
        %1548 = vmatprep.subr.bf16.mxu0 %v685
        %1549 = vmatpush1.bf16.msra.mxu0 %v684
        %1550 = vmatprep.subr.bf16.mxu0 %v688
        %1551 = vmatpush1.bf16.msra.mxu0 %v687
        %1552 = vmatprep.subr.bf16.mxu0 %v691
        %1553 = vmatpush1.bf16.msra.mxu0 %v690
        %1554 = vmatprep.subr.bf16.mxu0 %v694
        %1555 = vmatpush1.bf16.msra.mxu0 %v693
        %1556 = vmatprep.subr.bf16.mxu0 %v697
        %1557 = vmatpush1.bf16.msra.mxu0 %v696
        %1558 = vmatprep.subr.bf16.mxu0 %v700
        %1559 = vmatpush1.bf16.msra.mxu0 %v699
        %1560 = vmatprep.subr.bf16.mxu0 %v703
        %1561 = vmatpush1.bf16.msra.mxu0 %v702
        %1562 = vmatprep.subr.bf16.mxu0 0
        %1563 = vmatpush1.bf16.msra.mxu0 0
        %1564 = vmatprep.subr.bf16.mxu0 0
        %1565 = vmatpush1.bf16.msra.mxu0 0
        %1566 = vmatprep.subr.bf16.mxu0 0
        %1567 = vmatpush1.bf16.msra.mxu0 0
        %1568 = vmatprep.subr.bf16.mxu0 0
        %1569 = vmatpush1.bf16.msra.mxu0 0
        %1570 = vmatprep.subr.bf16.mxu0 0
        %1571 = vmatpush1.bf16.msra.mxu0 0
        %1572 = vmatprep.subr.bf16.mxu0 0
        %1573 = vmatpush1.bf16.msra.mxu0 0
        %1574 = vmatprep.subr.bf16.mxu0 0
        %1575 = vmatpush1.bf16.msra.mxu0 0
        %1576 = vmatprep.subr.bf16.mxu0 0
        %1577 = vmatpush1.bf16.msra.mxu0 0
        %1578 = vmatprep.mubr.bf16.mxu0 0
        %1579 = vmatmul.mubr.bf16.gmra.mrb[0].mxu0 %v1545
        %v1580 = vpop.f32.mrb[0].mxu0
        %v1581 = vadd.f32 0.0, %v1580
        %v1582 = vpop.f32.mrb[0].mxu0
        %v1583 = vadd.f32 0.0, %v1582
        %v1584 = vpop.f32.mrb[0].mxu0
        %v1585 = vpop.f32.mrb[0].mxu0
        %1586 = vdwg.mxu0
        %1587 = vmatprep.subr.bf16.mxu0 0
        %1588 = vmatpush1.bf16.msra.mxu0 %v683
        %1589 = vmatprep.subr.bf16.mxu0 0
        %1590 = vmatpush1.bf16.msra.mxu0 %v686
        %1591 = vmatprep.subr.bf16.mxu0 0
        %1592 = vmatpush1.bf16.msra.mxu0 %v689
        %1593 = vmatprep.subr.bf16.mxu0 0
        %1594 = vmatpush1.bf16.msra.mxu0 %v692
        %1595 = vmatprep.subr.bf16.mxu0 0
        %1596 = vmatpush1.bf16.msra.mxu0 %v695
        %1597 = vmatprep.subr.bf16.mxu0 0
        %1598 = vmatpush1.bf16.msra.mxu0 %v698
        %1599 = vmatprep.subr.bf16.mxu0 0
        %1600 = vmatpush1.bf16.msra.mxu0 %v701
        %1601 = vmatprep.subr.bf16.mxu0 0
        %1602 = vmatpush1.bf16.msra.mxu0 %v704
        %1603 = vmatprep.subr.bf16.mxu0 0
        %1604 = vmatpush1.bf16.msra.mxu0 0
        %1605 = vmatprep.subr.bf16.mxu0 0
        %1606 = vmatpush1.bf16.msra.mxu0 0
        %1607 = vmatprep.subr.bf16.mxu0 0
        %1608 = vmatpush1.bf16.msra.mxu0 0
        %1609 = vmatprep.subr.bf16.mxu0 0
        %1610 = vmatpush1.bf16.msra.mxu0 0
        %1611 = vmatprep.subr.bf16.mxu0 0
        %1612 = vmatpush1.bf16.msra.mxu0 0
        %1613 = vmatprep.subr.bf16.mxu0 0
        %1614 = vmatpush1.bf16.msra.mxu0 0
        %1615 = vmatprep.subr.bf16.mxu0 0
        %1616 = vmatpush1.bf16.msra.mxu0 0
        %1617 = vmatprep.subr.bf16.mxu0 0
        %1618 = vmatpush1.bf16.msra.mxu0 0
        %1619 = vmatprep.mubr.bf16.mxu0 0
        %1620 = vmatmul.mubr.bf16.gmra.mrb[0].mxu0 %v1545
        %v1621 = vpop.f32.mrb[0].mxu0
        %v1622 = vadd.f32 0.0, %v1621
        %v1623 = vpop.f32.mrb[0].mxu0
        %v1624 = vpop.f32.mrb[0].mxu0
        %v1625 = vpop.f32.mrb[0].mxu0
        %1626 = vdwg.mxu0
        %v1627 = vadd.f32 %v528, %v1581
        %v1628 = vxor.u32 %v1627, 2147483648
        %v1629 = vmul.f32 %v1628, 1.442695
        %v1630 = vpow.pop %v1629
        %v1631 = vadd.f32 %v1630, 1.0
        %v1632 = vrcp.pop %v1631
        %v1633 = vmul.f32 1.0, %v1632
        %v1634 = vadd.f32 %v530, %v1583
        %v1635 = vxor.u32 %v1634, 2147483648
        %v1636 = vmul.f32 %v1635, 1.442695
        %v1637 = vpow.pop %v1636
        %v1638 = vadd.f32 %v1637, 1.0
        %v1639 = vrcp.pop %v1638
        %v1640 = vmul.f32 1.0, %v1639
        %v1641 = vadd.f32 %v1622, %v828
        %v1642 = vmul.f32 %v1633, %v1641
        %v1643 = vadd.f32 %v594, %v1642
        %v1644 = vtanh.pop %v1643
        %v1645 = vsub.f32 1.0, %v1640
        %v1646 = vmul.f32 %v1645, %v1644
        %v1647 = vmul.f32 %v1640, %v1541
        %v1648 = vadd.f32 %v1646, %v1647
        %s1649 = sadd.s32 %s598, 7
        %v1650 = vstv %s1649
        %vm1651 = vcmp.lt.s32.totalorder %v1650, %v597
        %v1652 = vsel %vm1651, 1, 0
        %1653 = vset.pattern.permute.xlu0 0
        %1654 = vperm.xlu0 %1653, %v1652
        %v1655 = vpop.permute.xlu0 %1654
        %vm1656 = vcmp.eq.s32.totalorder %v1655, 1
        %v1657 = vsel %vm1656, %v1648, %v1541
        %v1658 = vsel %vm1656, %v1648, 0.0
        %v1659 = vpack.c.bf16 %v1658, %v1658
        %1660 = vst [vmem:[%s311 + $0x1c] sm:$0xf] %v1659
        %1661 = vst [vmem:[#allocation2] sm:$0xff] %v1657
        %p1662 = scmp.eq.s32.totalorder %s25, 1
        // Predicated region
        $region57: #{tpu_custom_call.1} parent=47 // pred_check
          %p1663 = pneg %p1662
        $region58: #{tpu_custom_call.1} parent=47 // pred_check_branch
          %1665 = sbr.rel (%p1663) target = $region60
        $region59: #{tpu_custom_call.1} parent=47 // pred_region
          %1666 = vst [vmem:[#allocation7] sm:$0xff] %v1657
        $region60: #{tpu_custom_call.1} parent=47 // pred_fallthru
          _
        %s1667 = sand.u32 %s185, 1
        %s1668 = scalar_lea.sflag [#allocation5], %s1667
        %s1669 = sand.u32 %s185, 1
        %s1670 = smul.addr %s1669, 32
        %s1671 = scalar_lea.vmem [#allocation6], %s1670
        // Predicated region
        $region61: #{tpu_custom_call.1} parent=47 // pred_check
          %p1672 = pneg %p195
        $region62: #{tpu_custom_call.1} parent=47 // pred_check_branch
          %1674 = sbr.rel (%p1672) target = $region64
        $region63: #{tpu_custom_call.1} parent=47 // pred_region
          %s1675 = smul.u32 8, %s25
          %s1677 = ssub.s32 512, 512
          %1678 = vsyncadd %s1668, %s1677
          %s1679 = smul.addr %s1675, 64
          %s1680 = scalar_lea.hbm %s7, %s1679
          %s1681 = sshll.u32 %s1671, 4
          %s1682 = int_to_ptr.vmem [resolvable:$true] %s1681
          %1687 = dma.vmem_to_hbm [thread:$0]  %s1682, 512, %s1680, %s1668, 64, 64, 4
        $region64: #{tpu_custom_call.1} parent=47 // pred_fallthru
          _
        // Predicated region
        $region65: #{tpu_custom_call.1} parent=47 // pred_check
          %p1688 = pneg %p216
        $region66: #{tpu_custom_call.1} parent=47 // pred_check_branch
          %1690 = sbr.rel (%p1688) target = $region68
        $region67: #{tpu_custom_call.1} parent=47 // pred_region
          %s1692 = ssub.s32 128, 128
          %1693 = vsyncadd [#allocation8], %s1692
          %s1695 = sshll.u32 [#allocation7], 4
          %s1696 = int_to_ptr.vmem [resolvable:$true] %s1695
          %1698 = dma.vmem_to_hbm [thread:$0]  %s1696, 128, %s8, [#allocation8]
        $region68: #{tpu_custom_call.1} parent=47 // pred_fallthru
          _
        // Predicated region
        $region69: #{tpu_custom_call.1} parent=47 // pred_check
          %p1699 = pneg %p216
        $region70: #{tpu_custom_call.1} parent=47 // pred_check_branch
          %1701 = sbr.rel (%p1699) target = $region72
        $region71: #{tpu_custom_call.1} parent=47 // pred_region
          %1702 = dma.done [#allocation8], 128
        $region72: #{tpu_custom_call.1} parent=47 // pred_fallthru
          _
      $region48: #{tpu_custom_call.1} parent=5 // pred_fallthru
        _
      %p1703 = scmp.le.s32.totalorder 2, %s20
      // Predicated region
      $region73: #{tpu_custom_call.1} parent=5 // pred_check
        %p1704 = pneg %p1703
      $region74: #{tpu_custom_call.1} parent=5 // pred_check_branch
        %1706 = sbr.rel (%p1704) target = $region76
      $region75: #{tpu_custom_call.1} parent=5 // pred_region
        %s1707 = ssub.s32 %s20, 2
        // Predicated region
        $region77: #{tpu_custom_call.1} parent=75 // pred_check
          %p1708 = pneg %p201
        $region78: #{tpu_custom_call.1} parent=75 // pred_check_branch
          %1710 = sbr.rel (%p1708) target = $region80
        $region79: #{tpu_custom_call.1} parent=75 // pred_region
          %s1711 = sand.u32 %s186, 1
          %s1712 = scalar_lea.sflag [#allocation5], %s1711
          %s1713 = sand.u32 %s186, 1
          %s1714 = smul.addr %s1713, 32
          %s1715 = scalar_lea.vmem [#allocation6], %s1714
          %1716 = dma.done %s1712, 512
        $region80: #{tpu_custom_call.1} parent=75 // pred_fallthru
          _
      $region76: #{tpu_custom_call.1} parent=5 // pred_fallthru
        _
    $region6: #{tpu_custom_call.1} parent=1 // loop_footer
      %s24 = sadd.s32 1, %s20
    $region7: #{tpu_custom_call.1} parent=1 // loop_footer_branch
      %19 = sbr.rel target = $region3
    $region8: #{tpu_custom_call.1} parent=1 // loop_exit
      _
    %1717 = vsyncpa [#allocation4], 1
    %s1718 = scalar_lea.sflag [#allocation4], 1
    %1719 = vsyncpa %s1718, 1
    %1720 = vsyncpa [#allocation5], 1
    %s1721 = scalar_lea.sflag [#allocation5], 1
    %1722 = vsyncpa %s1721, 1
    %1723 = vsyncpa [#allocation8], 1

</llo_original>
